<compile_context>
chip_gen: v7x
topology: tpu7x:2x2x1
jax: 0.10.0
libtpu: 0.0.40
codegen_flags: <defaults>
</compile_context>

<pallas_src>
import functools

import jax
import jax.numpy as jnp
from jax.experimental import pallas as pl
from jax.experimental.pallas import tpu as pltpu

# Small, forward-consistent demo sizes (module uses n_embed=384, block_size=256).
N_EMBED = 32
NUM_HEADS = 4
HEAD_SIZE = N_EMBED // NUM_HEADS
SEQ = 8
BATCH = 4
LN_EPS = 1e-5                     # PyTorch nn.LayerNorm default
MATMUL_DTYPE = jnp.bfloat16       # MXU-input dtype (accumulate in f32)
NEG_BIAS = -1e30                  # finite "masked" logit (exp underflows to 0)


def block_kernel(x_ref,            # (rows, C)      f32 activations (rows = seqs*T)
                 bias_ref,         # (T, T)         f32 additive causal bias (resident)
                 wqkv_ref,         # (C, 3*H*P)     bf16  [Wq*scale | Wk | Wv], head-padded
                 wproj_ref,        # (H*P, C)       bf16  zero rows at padded positions
                 w1_ref,           # (C, 4C)        bf16
                 w2_ref,           # (4C, C)        bf16
                 vecs_ref,         # (7, 4C)        f32  rows: g1,be1,g2,be2,bproj,b2 | b1
                 out_ref,          # (rows, C)
                 *, seqs, seq_len, num_heads, head_pad, exp_dtype):
    M, C = x_ref.shape
    Bq, T, H, P = seqs, seq_len, num_heads, head_pad
    HP = H * P

    x = x_ref[...].astype(jnp.float32)                       # (M, C)

    vecs = vecs_ref[...]
    g1, be1 = vecs[0:1, :C], vecs[1:2, :C]
    g2, be2 = vecs[2:3, :C], vecs[3:4, :C]
    bproj, b2 = vecs[4:5, :C], vecs[5:6, :C]
    b1 = vecs[6:7, :]                                         # (1, 4C)

    def layernorm(v, g, b):
        mu = jnp.mean(v, axis=-1, keepdims=True)
        var = jnp.mean((v - mu) ** 2, axis=-1, keepdims=True)
        return (v - mu) * jax.lax.rsqrt(var + LN_EPS) * g + b

    # --------- self-attention branch ---------
    xn = layernorm(x, g1, be1)                                # (M, C) f32

    # Fused QKV projection: one GEMM for all heads; scale folded into Wq.
    qkv = jnp.dot(xn.astype(MATMUL_DTYPE), wqkv_ref[...],
                  preferred_element_type=jnp.float32)         # (M, 3*HP) f32

    # Leading-dim reshapes only; all column offsets are multiples of 128.
    q = qkv[:, 0 * HP:1 * HP].reshape(Bq, T, HP)
    k = qkv[:, 1 * HP:2 * HP].reshape(Bq, T, HP)
    v = qkv[:, 2 * HP:3 * HP].reshape(Bq, T, HP)

    bias = bias_ref[...]                                      # (T, T) f32

    head_outs = []
    for h in range(H):                                        # static unroll over heads
        sl = slice(h * P, (h + 1) * P)                        # 128-lane aligned
        qh = q[:, :, sl].astype(MATMUL_DTYPE)                 # (Bq, T, P)
        kh = k[:, :, sl].astype(MATMUL_DTYPE)
        vh = v[:, :, sl].astype(MATMUL_DTYPE)

        # q @ k^T, batched over Bq, contracting last dims (zero pad -> no effect).
        s = jax.lax.dot_general(qh, kh, (((2,), (2,)), ((0,), (0,))),
                                preferred_element_type=jnp.float32)   # (Bq, T, T)
        s = s + bias
        s = s - jnp.max(s, axis=-1, keepdims=True)
        p = jnp.exp(s.astype(exp_dtype))                      # bf16 on v6e/v7x, f32 on v5e
        denom = jnp.sum(p.astype(jnp.float32), axis=-1, keepdims=True)
        # attention-dropout: identity (eval mode)
        o_h = jax.lax.dot_general(p.astype(MATMUL_DTYPE), vh,
                                  (((2,), (1,)), ((0,), (0,))),
                                  preferred_element_type=jnp.float32)  # (Bq, T, P)
        # normalize after p@V: (T, P) multiplies instead of (T, T)
        head_outs.append(o_h * pl.reciprocal(denom, approx=True))

    sa = jnp.concatenate(head_outs, axis=-1).reshape(M, HP)   # (M, HP) f32, aligned concat
    sa = jnp.dot(sa.astype(MATMUL_DTYPE), wproj_ref[...],
                 preferred_element_type=jnp.float32) + bproj
    # proj-dropout: identity (eval mode)
    x1 = x + sa

    # --------- feed-forward branch ---------
    xn2 = layernorm(x1, g2, be2)
    h1 = jnp.dot(xn2.astype(MATMUL_DTYPE), w1_ref[...],
                 preferred_element_type=jnp.float32) + b1
    h1 = jnp.maximum(h1, 0.0)                                 # ReLU in f32
    ff = jnp.dot(h1.astype(MATMUL_DTYPE), w2_ref[...],
                 preferred_element_type=jnp.float32) + b2
    # ffn-dropout: identity (eval mode)

    out_ref[...] = (x1 + ff).astype(out_ref.dtype)


def pack_params(params, head_pad):
    """Layout transform (outside the kernel): fuse/pack/pad weights."""
    (wq, wk, wv, wproj, bproj, g1, be1, g2, be2, w1, b1, w2, b2) = params
    H, C, hs = wq.shape
    P = head_pad
    scale = C ** (-0.5)   # reference scales by n_embed**-0.5; fold into Wq.

    def pad_heads(w, extra_scale=1.0):
        # (H, C, hs) -> (C, H*P): per-head column block padded hs -> P with zeros.
        wp = jnp.pad(w, ((0, 0), (0, 0), (0, P - hs)))               # (H, C, P)
        return jnp.transpose(wp, (1, 0, 2)).reshape(C, H * P) * extra_scale

    wq2 = pad_heads(wq, scale)
    wk2 = pad_heads(wk)
    wv2 = pad_heads(wv)
    wqkv = jnp.concatenate([wq2, wk2, wv2], axis=1).astype(MATMUL_DTYPE)  # (C, 3*H*P)

    # Wproj: (H*hs, C) -> (H*P, C), zero rows at the padded input positions.
    wproj_p = jnp.pad(wproj.reshape(H, hs, C), ((0, 0), (0, P - hs), (0, 0)))
    wproj_p = wproj_p.reshape(H * P, C).astype(MATMUL_DTYPE)

    # Vector slab (7, 4C): rows 0-5 are C-wide vectors zero-padded to 4C
    # (only [:, :C] read in-kernel); row 6 is the (4C,) FFN hidden bias.
    def padded(vec):
        return jnp.pad(vec, ((0, 0), (0, 3 * C)))
    vecs = jnp.concatenate([padded(g1), padded(be1), padded(g2), padded(be2),
                            padded(bproj), padded(b2), b1], axis=0)   # (7, 4C) f32

    return (wqkv, wproj_p,
            w1.astype(MATMUL_DTYPE), w2.astype(MATMUL_DTYPE), vecs)


def _device_kind():
    try:
        return jax.devices()[0].device_kind.lower()
    except Exception:
        return ""


def transformer_block(x, params):
    B, T, C = x.shape
    H = NUM_HEADS
    hs = C // H
    P = ((hs + 127) // 128) * 128          # pad head dim to full 128-lane tiles

    kind = _device_kind()
    is_v5 = "v5" in kind
    is_v6 = "v6" in kind
    is_v7 = ("v7" in kind) or ("7x" in kind)
    # bf16 exp only where the EUP supports bf16 (v6e/v7x); f32 elsewhere (v5e, etc.)
    exp_dtype = jnp.bfloat16 if (is_v6 or is_v7) else jnp.float32

    # Rows (= sequences) per grid step, generation-aware.
    if is_v5:
        target_rows = 1024                 # 128 MiB VMEM: amortize per-step overhead
    elif is_v6:
        target_rows = 512                  # 128 MiB VMEM, 918 TF/s MXU needs big tiles
    else:
        target_rows = 256                  # v7x: 64 MiB VMEM -> one T=256 seq per step
    spb = max(1, min(B, max(1, target_rows // T)))
    if B >= 2:
        spb = min(spb, B // 2)             # keep >=2 grid steps so both v7x TCs get work
    while B % spb:
        spb -= 1
    rows = spb * T
    grid = (B // spb,)

    wqkv, wproj_p, w1, w2, vecs = pack_params(params, P)

    # Additive causal bias, built once in the wrapper, resident in-kernel.
    bias = jnp.where(jnp.tril(jnp.ones((T, T), dtype=bool)),
                     0.0, NEG_BIAS).astype(jnp.float32)

    x2d = x.reshape(B * T, C)

    def resident(shape):  # constant block, single-buffered (saves VMEM headroom)
        return pl.BlockSpec(shape, lambda b: (0, 0), pipeline_mode=pl.Buffered(1))

    in_specs = [
        pl.BlockSpec((rows, C), lambda b: (b, 0)),   # x: tiled, double-buffered
        resident((T, T)),                            # causal bias
        resident((C, 3 * H * P)),                    # wqkv
        resident((H * P, C)),                        # wproj
        resident((C, 4 * C)),                        # w1
        resident((4 * C, C)),                        # w2
        resident((7, 4 * C)),                        # per-channel vector slab
    ]
    out_spec = pl.BlockSpec((rows, C), lambda b: (b, 0))

    # Raise the scoped-VMEM limit only for the big tiles allowed on v5e/v6e.
    vmem_limit = 100 * 1024 * 1024 if (is_v5 or is_v6) and rows > 256 else None

    kernel = functools.partial(block_kernel, seqs=spb, seq_len=T, num_heads=H,
                               head_pad=P, exp_dtype=exp_dtype)

    out2d = pl.pallas_call(
        kernel,
        out_shape=jax.ShapeDtypeStruct((B * T, C), x.dtype),
        grid=grid,
        in_specs=in_specs,
        out_specs=out_spec,
        compiler_params=pltpu.CompilerParams(
            dimension_semantics=("parallel",),
            vmem_limit_bytes=vmem_limit),
    )(x2d, bias, wqkv, wproj_p, w1, w2, vecs)
    return out2d.reshape(B, T, C)


def reference_block(x, params):
    """Pure-JAX f32 reference for correctness checking."""
    (wq, wk, wv, wproj, bproj, g1, beta1, g2, beta2, w1, b1, w2, b2) = params

    def layernorm(v, g, b):
        mu = jnp.mean(v, axis=-1, keepdims=True)
        var = jnp.mean((v - mu) ** 2, axis=-1, keepdims=True)
        return (v - mu) / jnp.sqrt(var + LN_EPS) * g + b

    B, T, C = x.shape
    xn = layernorm(x, g1[0], beta1[0])
    scale = C ** (-0.5)
    mask = jnp.tril(jnp.ones((T, T), bool))
    outs = []
    for h in range(NUM_HEADS):
        q = xn @ wq[h]
        k = xn @ wk[h]
        v = xn @ wv[h]
        s = jnp.einsum('btd,bsd->bts', q, k) * scale
        s = jnp.where(mask, s, -jnp.inf)
        p = jax.nn.softmax(s, axis=-1)
        outs.append(jnp.einsum('bts,bsd->btd', p, v))
    sa = jnp.concatenate(outs, axis=-1) @ wproj + bproj[0]
    x1 = x + sa
    xn2 = layernorm(x1, g2[0], beta2[0])
    ff = jax.nn.relu(xn2 @ w1 + b1[0]) @ w2 + b2[0]
    return x1 + ff


def init_params(key):
    ks = jax.random.split(key, 8)
    s = 0.02
    C, H, hs = N_EMBED, NUM_HEADS, HEAD_SIZE
    wq = s * jax.random.normal(ks[0], (H, C, hs), jnp.float32)
    wk = s * jax.random.normal(ks[1], (H, C, hs), jnp.float32)
    wv = s * jax.random.normal(ks[2], (H, C, hs), jnp.float32)
    wproj = s * jax.random.normal(ks[3], (C, C), jnp.float32)
    bproj = s * jax.random.normal(ks[4], (1, C), jnp.float32)
    g1 = jnp.ones((1, C), jnp.float32)
    beta1 = jnp.zeros((1, C), jnp.float32)
    g2 = jnp.ones((1, C), jnp.float32)
    beta2 = jnp.zeros((1, C), jnp.float32)
    w1 = s * jax.random.normal(ks[5], (C, 4 * C), jnp.float32)
    b1 = s * jax.random.normal(ks[6], (1, 4 * C), jnp.float32)
    w2 = s * jax.random.normal(ks[7], (4 * C, C), jnp.float32)
    b2 = jnp.zeros((1, C), jnp.float32)
    return (wq, wk, wv, wproj, bproj, g1, beta1, g2, beta2, w1, b1, w2, b2)


if __name__ == "__main__":
    key = jax.random.PRNGKey(0)
    pkey, xkey = jax.random.split(key)
    params = init_params(pkey)
    x = jax.random.normal(xkey, (BATCH, SEQ, N_EMBED), jnp.float32)

    out = transformer_block(x, params)
    out = jax.block_until_ready(out)

    ref = reference_block(x, params)
    assert out.shape == (BATCH, SEQ, N_EMBED)
    # bf16 MXU inputs (+ bf16 exp on v6e/v7x) + approx reciprocal -> validate
    # against the f32 reference with a correspondingly looser tolerance.
    assert jnp.allclose(out, ref, atol=1e-2, rtol=1e-2), "mismatch vs reference"
    print("KERNEL_OK")
</pallas_src>

<mosaic_0001>
module attributes {stable_mosaic.version = 11 : i64} {
  func.func @block_kernel(%arg0: i32, %arg1: memref<16x32xf32, #tpu.memory_space<vmem>>, %arg2: memref<8x8xf32, #tpu.memory_space<vmem>>, %arg3: memref<32x1536xbf16, #tpu.memory_space<vmem>>, %arg4: memref<512x32xbf16, #tpu.memory_space<vmem>>, %arg5: memref<32x128xbf16, #tpu.memory_space<vmem>>, %arg6: memref<128x32xbf16, #tpu.memory_space<vmem>>, %arg7: memref<7x128xf32, #tpu.memory_space<vmem>>, %arg8: memref<16x32xf32, #tpu.memory_space<vmem>>) attributes {dimension_semantics = [#tpu.dimension_semantics<parallel>], iteration_bounds = array<i64: 2>, scalar_prefetch = 0 : i64, scratch_operands = 0 : i64, tpu.core_type = #tpu.core_type<tc>, window_params = [{transform_indices = @transform_0, window_bounds = array<i64: 16, 32>}, {pipeline_mode = #tpu.pipeline_mode<synchronous>, transform_indices = @transform_1, window_bounds = array<i64: 8, 8>}, {pipeline_mode = #tpu.pipeline_mode<synchronous>, transform_indices = @transform_2, window_bounds = array<i64: 32, 1536>}, {pipeline_mode = #tpu.pipeline_mode<synchronous>, transform_indices = @transform_3, window_bounds = array<i64: 512, 32>}, {pipeline_mode = #tpu.pipeline_mode<synchronous>, transform_indices = @transform_4, window_bounds = array<i64: 32, 128>}, {pipeline_mode = #tpu.pipeline_mode<synchronous>, transform_indices = @transform_5, window_bounds = array<i64: 128, 32>}, {pipeline_mode = #tpu.pipeline_mode<synchronous>, transform_indices = @transform_6, window_bounds = array<i64: 7, 128>}, {transform_indices = @transform_7, window_bounds = array<i64: 16, 32>}]} {
    %c0 = arith.constant 0 : index
    %c0_0 = arith.constant 0 : index
    %0 = vector.load %arg1[%c0, %c0_0] : memref<16x32xf32, #tpu.memory_space<vmem>>, vector<16x32xf32>
    %c0_1 = arith.constant 0 : index
    %c0_2 = arith.constant 0 : index
    %1 = vector.load %arg7[%c0_1, %c0_2] : memref<7x128xf32, #tpu.memory_space<vmem>>, vector<7x128xf32>
    %2 = vector.extract_strided_slice %1 {offsets = [0, 0], sizes = [1, 32], strides = [1, 1]} : vector<7x128xf32> to vector<1x32xf32>
    %3 = vector.extract_strided_slice %1 {offsets = [1, 0], sizes = [1, 32], strides = [1, 1]} : vector<7x128xf32> to vector<1x32xf32>
    %4 = vector.extract_strided_slice %1 {offsets = [2, 0], sizes = [1, 32], strides = [1, 1]} : vector<7x128xf32> to vector<1x32xf32>
    %5 = vector.extract_strided_slice %1 {offsets = [3, 0], sizes = [1, 32], strides = [1, 1]} : vector<7x128xf32> to vector<1x32xf32>
    %6 = vector.extract_strided_slice %1 {offsets = [4, 0], sizes = [1, 32], strides = [1, 1]} : vector<7x128xf32> to vector<1x32xf32>
    %7 = vector.extract_strided_slice %1 {offsets = [5, 0], sizes = [1, 32], strides = [1, 1]} : vector<7x128xf32> to vector<1x32xf32>
    %8 = vector.extract_strided_slice %1 {offsets = [6, 0], sizes = [1, 128], strides = [1, 1]} : vector<7x128xf32> to vector<1x128xf32>
    %cst = arith.constant dense<0.000000e+00> : vector<16xf32>
    %9 = vector.multi_reduction <add>, %0, %cst [1] : vector<16x32xf32> to vector<16xf32>
    %10 = vector.shape_cast %9 : vector<16xf32> to vector<16x1xf32>
    %cst_3 = arith.constant 3.200000e+01 : f32
    %11 = vector.broadcast %cst_3 : f32 to vector<16x1xf32>
    %12 = arith.divf %10, %11 : vector<16x1xf32>
    %13 = vector.broadcast %12 : vector<16x1xf32> to vector<16x32xf32>
    %14 = arith.subf %0, %13 : vector<16x32xf32>
    %15 = arith.mulf %14, %14 : vector<16x32xf32>
    %cst_4 = arith.constant dense<0.000000e+00> : vector<16xf32>
    %16 = vector.multi_reduction <add>, %15, %cst_4 [1] : vector<16x32xf32> to vector<16xf32>
    %17 = vector.shape_cast %16 : vector<16xf32> to vector<16x1xf32>
    %cst_5 = arith.constant 3.200000e+01 : f32
    %18 = vector.broadcast %cst_5 : f32 to vector<16x1xf32>
    %19 = arith.divf %17, %18 : vector<16x1xf32>
    %20 = vector.broadcast %12 : vector<16x1xf32> to vector<16x32xf32>
    %21 = arith.subf %0, %20 : vector<16x32xf32>
    %cst_6 = arith.constant 9.99999974E-6 : f32
    %22 = vector.broadcast %cst_6 : f32 to vector<16x1xf32>
    %23 = arith.addf %19, %22 : vector<16x1xf32>
    %24 = math.rsqrt %23 : vector<16x1xf32>
    %25 = vector.broadcast %24 : vector<16x1xf32> to vector<16x32xf32>
    %26 = arith.mulf %21, %25 : vector<16x32xf32>
    %27 = vector.broadcast %2 : vector<1x32xf32> to vector<16x32xf32>
    %28 = arith.mulf %26, %27 : vector<16x32xf32>
    %29 = vector.broadcast %3 : vector<1x32xf32> to vector<16x32xf32>
    %30 = arith.addf %28, %29 : vector<16x32xf32>
    %31 = arith.truncf %30 : vector<16x32xf32> to vector<16x32xbf16>
    %c0_7 = arith.constant 0 : index
    %c0_8 = arith.constant 0 : index
    %32 = vector.load %arg3[%c0_7, %c0_8] : memref<32x1536xbf16, #tpu.memory_space<vmem>>, vector<32x1536xbf16>
    %cst_9 = arith.constant dense<0.000000e+00> : vector<16x1536xf32>
    %33 = tpu.matmul %31, %32, %cst_9 {dimension_numbers = #tpu.dot_dimension_numbers<[1], [0], [0], [1], [0, 0, 1, 1], [], []>} : vector<16x32xbf16>, vector<32x1536xbf16>, vector<16x1536xf32> -> vector<16x1536xf32>
    %34 = vector.extract_strided_slice %33 {offsets = [0, 0], sizes = [16, 512], strides = [1, 1]} : vector<16x1536xf32> to vector<16x512xf32>
    %35 = vector.shape_cast %34 : vector<16x512xf32> to vector<2x8x512xf32>
    %36 = vector.extract_strided_slice %33 {offsets = [0, 512], sizes = [16, 512], strides = [1, 1]} : vector<16x1536xf32> to vector<16x512xf32>
    %37 = vector.shape_cast %36 : vector<16x512xf32> to vector<2x8x512xf32>
    %38 = vector.extract_strided_slice %33 {offsets = [0, 1024], sizes = [16, 512], strides = [1, 1]} : vector<16x1536xf32> to vector<16x512xf32>
    %39 = vector.shape_cast %38 : vector<16x512xf32> to vector<2x8x512xf32>
    %c0_10 = arith.constant 0 : index
    %c0_11 = arith.constant 0 : index
    %40 = vector.load %arg2[%c0_10, %c0_11] : memref<8x8xf32, #tpu.memory_space<vmem>>, vector<8x8xf32>
    %41 = vector.extract_strided_slice %35 {offsets = [0, 0, 0], sizes = [2, 8, 128], strides = [1, 1, 1]} : vector<2x8x512xf32> to vector<2x8x128xf32>
    %42 = arith.truncf %41 : vector<2x8x128xf32> to vector<2x8x128xbf16>
    %43 = vector.extract_strided_slice %37 {offsets = [0, 0, 0], sizes = [2, 8, 128], strides = [1, 1, 1]} : vector<2x8x512xf32> to vector<2x8x128xf32>
    %44 = arith.truncf %43 : vector<2x8x128xf32> to vector<2x8x128xbf16>
    %45 = vector.extract_strided_slice %39 {offsets = [0, 0, 0], sizes = [2, 8, 128], strides = [1, 1, 1]} : vector<2x8x512xf32> to vector<2x8x128xf32>
    %46 = arith.truncf %45 : vector<2x8x128xf32> to vector<2x8x128xbf16>
    %cst_12 = arith.constant dense<0.000000e+00> : vector<2x8x8xf32>
    %47 = tpu.matmul %42, %44, %cst_12 {dimension_numbers = #tpu.dot_dimension_numbers<[2], [2], [1], [1], [0, 0, 0, 1, 1, 1], [0], [0]>} : vector<2x8x128xbf16>, vector<2x8x128xbf16>, vector<2x8x8xf32> -> vector<2x8x8xf32>
    %48 = vector.shape_cast %40 : vector<8x8xf32> to vector<1x8x8xf32>
    %49 = vector.broadcast %48 : vector<1x8x8xf32> to vector<2x8x8xf32>
    %50 = arith.addf %47, %49 : vector<2x8x8xf32>
    %cst_13 = arith.constant dense<0xFF800000> : vector<2x8xf32>
    %51 = vector.multi_reduction <maximumf>, %50, %cst_13 [2] : vector<2x8x8xf32> to vector<2x8xf32>
    %52 = vector.shape_cast %51 : vector<2x8xf32> to vector<2x8x1xf32>
    %53 = vector.broadcast %52 : vector<2x8x1xf32> to vector<2x8x8xf32>
    %54 = arith.subf %50, %53 : vector<2x8x8xf32>
    %55 = math.exp %54 : vector<2x8x8xf32>
    %cst_14 = arith.constant dense<0.000000e+00> : vector<2x8xf32>
    %56 = vector.multi_reduction <add>, %55, %cst_14 [2] : vector<2x8x8xf32> to vector<2x8xf32>
    %57 = vector.shape_cast %56 : vector<2x8xf32> to vector<2x8x1xf32>
    %58 = arith.truncf %55 : vector<2x8x8xf32> to vector<2x8x8xbf16>
    %cst_15 = arith.constant dense<0.000000e+00> : vector<2x8x128xf32>
    %59 = tpu.matmul %58, %46, %cst_15 {dimension_numbers = #tpu.dot_dimension_numbers<[2], [1], [1], [2], [0, 0, 0, 1, 1, 2], [0], [0]>} : vector<2x8x8xbf16>, vector<2x8x128xbf16>, vector<2x8x128xf32> -> vector<2x8x128xf32>
    %60 = tpu.reciprocal %57 {approx = true} : vector<2x8x1xf32> -> vector<2x8x1xf32>
    %61 = vector.broadcast %60 : vector<2x8x1xf32> to vector<2x8x128xf32>
    %62 = arith.mulf %59, %61 : vector<2x8x128xf32>
    %63 = vector.extract_strided_slice %35 {offsets = [0, 0, 128], sizes = [2, 8, 128], strides = [1, 1, 1]} : vector<2x8x512xf32> to vector<2x8x128xf32>
    %64 = arith.truncf %63 : vector<2x8x128xf32> to vector<2x8x128xbf16>
    %65 = vector.extract_strided_slice %37 {offsets = [0, 0, 128], sizes = [2, 8, 128], strides = [1, 1, 1]} : vector<2x8x512xf32> to vector<2x8x128xf32>
    %66 = arith.truncf %65 : vector<2x8x128xf32> to vector<2x8x128xbf16>
    %67 = vector.extract_strided_slice %39 {offsets = [0, 0, 128], sizes = [2, 8, 128], strides = [1, 1, 1]} : vector<2x8x512xf32> to vector<2x8x128xf32>
    %68 = arith.truncf %67 : vector<2x8x128xf32> to vector<2x8x128xbf16>
    %cst_16 = arith.constant dense<0.000000e+00> : vector<2x8x8xf32>
    %69 = tpu.matmul %64, %66, %cst_16 {dimension_numbers = #tpu.dot_dimension_numbers<[2], [2], [1], [1], [0, 0, 0, 1, 1, 1], [0], [0]>} : vector<2x8x128xbf16>, vector<2x8x128xbf16>, vector<2x8x8xf32> -> vector<2x8x8xf32>
    %70 = vector.shape_cast %40 : vector<8x8xf32> to vector<1x8x8xf32>
    %71 = vector.broadcast %70 : vector<1x8x8xf32> to vector<2x8x8xf32>
    %72 = arith.addf %69, %71 : vector<2x8x8xf32>
    %cst_17 = arith.constant dense<0xFF800000> : vector<2x8xf32>
    %73 = vector.multi_reduction <maximumf>, %72, %cst_17 [2] : vector<2x8x8xf32> to vector<2x8xf32>
    %74 = vector.shape_cast %73 : vector<2x8xf32> to vector<2x8x1xf32>
    %75 = vector.broadcast %74 : vector<2x8x1xf32> to vector<2x8x8xf32>
    %76 = arith.subf %72, %75 : vector<2x8x8xf32>
    %77 = math.exp %76 : vector<2x8x8xf32>
    %cst_18 = arith.constant dense<0.000000e+00> : vector<2x8xf32>
    %78 = vector.multi_reduction <add>, %77, %cst_18 [2] : vector<2x8x8xf32> to vector<2x8xf32>
    %79 = vector.shape_cast %78 : vector<2x8xf32> to vector<2x8x1xf32>
    %80 = arith.truncf %77 : vector<2x8x8xf32> to vector<2x8x8xbf16>
    %cst_19 = arith.constant dense<0.000000e+00> : vector<2x8x128xf32>
    %81 = tpu.matmul %80, %68, %cst_19 {dimension_numbers = #tpu.dot_dimension_numbers<[2], [1], [1], [2], [0, 0, 0, 1, 1, 2], [0], [0]>} : vector<2x8x8xbf16>, vector<2x8x128xbf16>, vector<2x8x128xf32> -> vector<2x8x128xf32>
    %82 = tpu.reciprocal %79 {approx = true} : vector<2x8x1xf32> -> vector<2x8x1xf32>
    %83 = vector.broadcast %82 : vector<2x8x1xf32> to vector<2x8x128xf32>
    %84 = arith.mulf %81, %83 : vector<2x8x128xf32>
    %85 = vector.extract_strided_slice %35 {offsets = [0, 0, 256], sizes = [2, 8, 128], strides = [1, 1, 1]} : vector<2x8x512xf32> to vector<2x8x128xf32>
    %86 = arith.truncf %85 : vector<2x8x128xf32> to vector<2x8x128xbf16>
    %87 = vector.extract_strided_slice %37 {offsets = [0, 0, 256], sizes = [2, 8, 128], strides = [1, 1, 1]} : vector<2x8x512xf32> to vector<2x8x128xf32>
    %88 = arith.truncf %87 : vector<2x8x128xf32> to vector<2x8x128xbf16>
    %89 = vector.extract_strided_slice %39 {offsets = [0, 0, 256], sizes = [2, 8, 128], strides = [1, 1, 1]} : vector<2x8x512xf32> to vector<2x8x128xf32>
    %90 = arith.truncf %89 : vector<2x8x128xf32> to vector<2x8x128xbf16>
    %cst_20 = arith.constant dense<0.000000e+00> : vector<2x8x8xf32>
    %91 = tpu.matmul %86, %88, %cst_20 {dimension_numbers = #tpu.dot_dimension_numbers<[2], [2], [1], [1], [0, 0, 0, 1, 1, 1], [0], [0]>} : vector<2x8x128xbf16>, vector<2x8x128xbf16>, vector<2x8x8xf32> -> vector<2x8x8xf32>
    %92 = vector.shape_cast %40 : vector<8x8xf32> to vector<1x8x8xf32>
    %93 = vector.broadcast %92 : vector<1x8x8xf32> to vector<2x8x8xf32>
    %94 = arith.addf %91, %93 : vector<2x8x8xf32>
    %cst_21 = arith.constant dense<0xFF800000> : vector<2x8xf32>
    %95 = vector.multi_reduction <maximumf>, %94, %cst_21 [2] : vector<2x8x8xf32> to vector<2x8xf32>
    %96 = vector.shape_cast %95 : vector<2x8xf32> to vector<2x8x1xf32>
    %97 = vector.broadcast %96 : vector<2x8x1xf32> to vector<2x8x8xf32>
    %98 = arith.subf %94, %97 : vector<2x8x8xf32>
    %99 = math.exp %98 : vector<2x8x8xf32>
    %cst_22 = arith.constant dense<0.000000e+00> : vector<2x8xf32>
    %100 = vector.multi_reduction <add>, %99, %cst_22 [2] : vector<2x8x8xf32> to vector<2x8xf32>
    %101 = vector.shape_cast %100 : vector<2x8xf32> to vector<2x8x1xf32>
    %102 = arith.truncf %99 : vector<2x8x8xf32> to vector<2x8x8xbf16>
    %cst_23 = arith.constant dense<0.000000e+00> : vector<2x8x128xf32>
    %103 = tpu.matmul %102, %90, %cst_23 {dimension_numbers = #tpu.dot_dimension_numbers<[2], [1], [1], [2], [0, 0, 0, 1, 1, 2], [0], [0]>} : vector<2x8x8xbf16>, vector<2x8x128xbf16>, vector<2x8x128xf32> -> vector<2x8x128xf32>
    %104 = tpu.reciprocal %101 {approx = true} : vector<2x8x1xf32> -> vector<2x8x1xf32>
    %105 = vector.broadcast %104 : vector<2x8x1xf32> to vector<2x8x128xf32>
    %106 = arith.mulf %103, %105 : vector<2x8x128xf32>
    %107 = vector.extract_strided_slice %35 {offsets = [0, 0, 384], sizes = [2, 8, 128], strides = [1, 1, 1]} : vector<2x8x512xf32> to vector<2x8x128xf32>
    %108 = arith.truncf %107 : vector<2x8x128xf32> to vector<2x8x128xbf16>
    %109 = vector.extract_strided_slice %37 {offsets = [0, 0, 384], sizes = [2, 8, 128], strides = [1, 1, 1]} : vector<2x8x512xf32> to vector<2x8x128xf32>
    %110 = arith.truncf %109 : vector<2x8x128xf32> to vector<2x8x128xbf16>
    %111 = vector.extract_strided_slice %39 {offsets = [0, 0, 384], sizes = [2, 8, 128], strides = [1, 1, 1]} : vector<2x8x512xf32> to vector<2x8x128xf32>
    %112 = arith.truncf %111 : vector<2x8x128xf32> to vector<2x8x128xbf16>
    %cst_24 = arith.constant dense<0.000000e+00> : vector<2x8x8xf32>
    %113 = tpu.matmul %108, %110, %cst_24 {dimension_numbers = #tpu.dot_dimension_numbers<[2], [2], [1], [1], [0, 0, 0, 1, 1, 1], [0], [0]>} : vector<2x8x128xbf16>, vector<2x8x128xbf16>, vector<2x8x8xf32> -> vector<2x8x8xf32>
    %114 = vector.shape_cast %40 : vector<8x8xf32> to vector<1x8x8xf32>
    %115 = vector.broadcast %114 : vector<1x8x8xf32> to vector<2x8x8xf32>
    %116 = arith.addf %113, %115 : vector<2x8x8xf32>
    %cst_25 = arith.constant dense<0xFF800000> : vector<2x8xf32>
    %117 = vector.multi_reduction <maximumf>, %116, %cst_25 [2] : vector<2x8x8xf32> to vector<2x8xf32>
    %118 = vector.shape_cast %117 : vector<2x8xf32> to vector<2x8x1xf32>
    %119 = vector.broadcast %118 : vector<2x8x1xf32> to vector<2x8x8xf32>
    %120 = arith.subf %116, %119 : vector<2x8x8xf32>
    %121 = math.exp %120 : vector<2x8x8xf32>
    %cst_26 = arith.constant dense<0.000000e+00> : vector<2x8xf32>
    %122 = vector.multi_reduction <add>, %121, %cst_26 [2] : vector<2x8x8xf32> to vector<2x8xf32>
    %123 = vector.shape_cast %122 : vector<2x8xf32> to vector<2x8x1xf32>
    %124 = arith.truncf %121 : vector<2x8x8xf32> to vector<2x8x8xbf16>
    %cst_27 = arith.constant dense<0.000000e+00> : vector<2x8x128xf32>
    %125 = tpu.matmul %124, %112, %cst_27 {dimension_numbers = #tpu.dot_dimension_numbers<[2], [1], [1], [2], [0, 0, 0, 1, 1, 2], [0], [0]>} : vector<2x8x8xbf16>, vector<2x8x128xbf16>, vector<2x8x128xf32> -> vector<2x8x128xf32>
    %126 = tpu.reciprocal %123 {approx = true} : vector<2x8x1xf32> -> vector<2x8x1xf32>
    %127 = vector.broadcast %126 : vector<2x8x1xf32> to vector<2x8x128xf32>
    %128 = arith.mulf %125, %127 : vector<2x8x128xf32>
    %129 = tpu.concatenate %62, %84, %106, %128 in 2 : vector<2x8x128xf32>, vector<2x8x128xf32>, vector<2x8x128xf32>, vector<2x8x128xf32> -> vector<2x8x512xf32>
    %130 = vector.shape_cast %129 : vector<2x8x512xf32> to vector<16x512xf32>
    %131 = arith.truncf %130 : vector<16x512xf32> to vector<16x512xbf16>
    %c0_28 = arith.constant 0 : index
    %c0_29 = arith.constant 0 : index
    %132 = vector.load %arg4[%c0_28, %c0_29] : memref<512x32xbf16, #tpu.memory_space<vmem>>, vector<512x32xbf16>
    %cst_30 = arith.constant dense<0.000000e+00> : vector<16x32xf32>
    %133 = tpu.matmul %131, %132, %cst_30 {dimension_numbers = #tpu.dot_dimension_numbers<[1], [0], [0], [1], [0, 0, 1, 1], [], []>} : vector<16x512xbf16>, vector<512x32xbf16>, vector<16x32xf32> -> vector<16x32xf32>
    %134 = vector.broadcast %6 : vector<1x32xf32> to vector<16x32xf32>
    %135 = arith.addf %133, %134 : vector<16x32xf32>
    %136 = arith.addf %0, %135 : vector<16x32xf32>
    %cst_31 = arith.constant dense<0.000000e+00> : vector<16xf32>
    %137 = vector.multi_reduction <add>, %136, %cst_31 [1] : vector<16x32xf32> to vector<16xf32>
    %138 = vector.shape_cast %137 : vector<16xf32> to vector<16x1xf32>
    %cst_32 = arith.constant 3.200000e+01 : f32
    %139 = vector.broadcast %cst_32 : f32 to vector<16x1xf32>
    %140 = arith.divf %138, %139 : vector<16x1xf32>
    %141 = vector.broadcast %140 : vector<16x1xf32> to vector<16x32xf32>
    %142 = arith.subf %136, %141 : vector<16x32xf32>
    %143 = arith.mulf %142, %142 : vector<16x32xf32>
    %cst_33 = arith.constant dense<0.000000e+00> : vector<16xf32>
    %144 = vector.multi_reduction <add>, %143, %cst_33 [1] : vector<16x32xf32> to vector<16xf32>
    %145 = vector.shape_cast %144 : vector<16xf32> to vector<16x1xf32>
    %cst_34 = arith.constant 3.200000e+01 : f32
    %146 = vector.broadcast %cst_34 : f32 to vector<16x1xf32>
    %147 = arith.divf %145, %146 : vector<16x1xf32>
    %148 = vector.broadcast %140 : vector<16x1xf32> to vector<16x32xf32>
    %149 = arith.subf %136, %148 : vector<16x32xf32>
    %cst_35 = arith.constant 9.99999974E-6 : f32
    %150 = vector.broadcast %cst_35 : f32 to vector<16x1xf32>
    %151 = arith.addf %147, %150 : vector<16x1xf32>
    %152 = math.rsqrt %151 : vector<16x1xf32>
    %153 = vector.broadcast %152 : vector<16x1xf32> to vector<16x32xf32>
    %154 = arith.mulf %149, %153 : vector<16x32xf32>
    %155 = vector.broadcast %4 : vector<1x32xf32> to vector<16x32xf32>
    %156 = arith.mulf %154, %155 : vector<16x32xf32>
    %157 = vector.broadcast %5 : vector<1x32xf32> to vector<16x32xf32>
    %158 = arith.addf %156, %157 : vector<16x32xf32>
    %159 = arith.truncf %158 : vector<16x32xf32> to vector<16x32xbf16>
    %c0_36 = arith.constant 0 : index
    %c0_37 = arith.constant 0 : index
    %160 = vector.load %arg5[%c0_36, %c0_37] : memref<32x128xbf16, #tpu.memory_space<vmem>>, vector<32x128xbf16>
    %cst_38 = arith.constant dense<0.000000e+00> : vector<16x128xf32>
    %161 = tpu.matmul %159, %160, %cst_38 {dimension_numbers = #tpu.dot_dimension_numbers<[1], [0], [0], [1], [0, 0, 1, 1], [], []>} : vector<16x32xbf16>, vector<32x128xbf16>, vector<16x128xf32> -> vector<16x128xf32>
    %162 = vector.broadcast %8 : vector<1x128xf32> to vector<16x128xf32>
    %163 = arith.addf %161, %162 : vector<16x128xf32>
    %cst_39 = arith.constant 0.000000e+00 : f32
    %164 = vector.broadcast %cst_39 : f32 to vector<16x128xf32>
    %165 = arith.maximumf %163, %164 : vector<16x128xf32>
    %166 = arith.truncf %165 : vector<16x128xf32> to vector<16x128xbf16>
    %c0_40 = arith.constant 0 : index
    %c0_41 = arith.constant 0 : index
    %167 = vector.load %arg6[%c0_40, %c0_41] : memref<128x32xbf16, #tpu.memory_space<vmem>>, vector<128x32xbf16>
    %cst_42 = arith.constant dense<0.000000e+00> : vector<16x32xf32>
    %168 = tpu.matmul %166, %167, %cst_42 {dimension_numbers = #tpu.dot_dimension_numbers<[1], [0], [0], [1], [0, 0, 1, 1], [], []>} : vector<16x128xbf16>, vector<128x32xbf16>, vector<16x32xf32> -> vector<16x32xf32>
    %169 = vector.broadcast %7 : vector<1x32xf32> to vector<16x32xf32>
    %170 = arith.addf %168, %169 : vector<16x32xf32>
    %171 = arith.addf %136, %170 : vector<16x32xf32>
    %c0_43 = arith.constant 0 : index
    %c0_44 = arith.constant 0 : index
    %172 = vector.load %arg8[%c0_43, %c0_44] : memref<16x32xf32, #tpu.memory_space<vmem>>, vector<16x32xf32>
    tpu.vector_store %arg8[%c0_43, %c0_44], %171 {strides = array<i32>} : memref<16x32xf32, #tpu.memory_space<vmem>>, vector<16x32xf32>,
    return
  }
  func.func @transform_0(%arg0: i32) -> (i32, i32) {
    %c0_i32 = arith.constant 0 : i32
    %c0_i32_0 = arith.constant 0 : i32
    return %arg0, %c0_i32 : i32, i32
  }
  func.func @transform_1(%arg0: i32) -> (i32, i32) {
    %c0_i32 = arith.constant 0 : i32
    %c0_i32_0 = arith.constant 0 : i32
    %c0_i32_1 = arith.constant 0 : i32
    return %c0_i32, %c0_i32_0 : i32, i32
  }
  func.func @transform_2(%arg0: i32) -> (i32, i32) {
    %c0_i32 = arith.constant 0 : i32
    %c0_i32_0 = arith.constant 0 : i32
    %c0_i32_1 = arith.constant 0 : i32
    return %c0_i32, %c0_i32_0 : i32, i32
  }
  func.func @transform_3(%arg0: i32) -> (i32, i32) {
    %c0_i32 = arith.constant 0 : i32
    %c0_i32_0 = arith.constant 0 : i32
    %c0_i32_1 = arith.constant 0 : i32
    return %c0_i32, %c0_i32_0 : i32, i32
  }
  func.func @transform_4(%arg0: i32) -> (i32, i32) {
    %c0_i32 = arith.constant 0 : i32
    %c0_i32_0 = arith.constant 0 : i32
    %c0_i32_1 = arith.constant 0 : i32
    return %c0_i32, %c0_i32_0 : i32, i32
  }
  func.func @transform_5(%arg0: i32) -> (i32, i32) {
    %c0_i32 = arith.constant 0 : i32
    %c0_i32_0 = arith.constant 0 : i32
    %c0_i32_1 = arith.constant 0 : i32
    return %c0_i32, %c0_i32_0 : i32, i32
  }
  func.func @transform_6(%arg0: i32) -> (i32, i32) {
    %c0_i32 = arith.constant 0 : i32
    %c0_i32_0 = arith.constant 0 : i32
    %c0_i32_1 = arith.constant 0 : i32
    return %c0_i32, %c0_i32_0 : i32, i32
  }
  func.func @transform_7(%arg0: i32) -> (i32, i32) {
    %c0_i32 = arith.constant 0 : i32
    %c0_i32_0 = arith.constant 0 : i32
    return %arg0, %c0_i32 : i32, i32
  }
}

</mosaic_0001>

<llo_original>
// kernel: tpu_custom_call.1
$region0: #{tpu_custom_call.1}
  #allocation0 [shape = 'u32[]', space=smem, size = 0x4, offset = 0x4, fixed_abs, tag = 'smem constant byte address 0x4 - core index']
  #allocation1 [shape = 'u32[144,128]{1,0:T(1,128)}', space=vmem, size = 0x12000, scoped, tag = 'internal scratch']
  %s0 = inlined_call_operand.vmem [shape: f32[32,32], index: 0, kind: input, shape index: {}]
  %s1 = inlined_call_operand.vmem [shape: f32[8,8], index: 1, kind: input, shape index: {}]
  %s2 = inlined_call_operand.vmem [shape: bf16[32,1536], index: 2, kind: input, shape index: {}]
  %s3 = inlined_call_operand.vmem [shape: bf16[512,32], index: 3, kind: input, shape index: {}]
  %s4 = inlined_call_operand.vmem [shape: bf16[32,128], index: 4, kind: input, shape index: {}]
  %s5 = inlined_call_operand.vmem [shape: bf16[128,32], index: 5, kind: input, shape index: {}]
  %s6 = inlined_call_operand.vmem [shape: f32[7,128], index: 6, kind: input, shape index: {}]
  %s7 = inlined_call_operand.hbm [shape: f32[32,32], index: 7, kind: output, shape index: {}]
  %s8 = sld [smem:[#allocation0]]
  $region61: #{tpu_custom_call.1} parent=0
    _
  %s10 = ssub.s32 1, %s8
  %s11 = scalar_select 0, %s10, %s8
  $region1: #{tpu_custom_call.1} parent=0
    #allocation2 [shape = 'u8[16384]{0}', space=vmem, size = 0x4000, scoped, tag = 'output window, operand 0']
    #allocation3 [shape = 's32[2]{0}', space=sflag, size = 0x8, scoped, tag = 'scoped memory for tpu_custom_call.1']
    %12 = vsyncpa [#allocation3], 0
    %s13 = scalar_lea.sflag [#allocation3], 1
    %14 = vsyncpa %s13, 0
    loop: start=0, step=1, limit=4
    $region2: #{tpu_custom_call.1} parent=1 // loop_pre_header
      _
    $region3: #{tpu_custom_call.1} parent=1 // loop_header
      %s16 = sphi 0, %s20
      %p17 = scmp.ge.s32.totalorder %s16, 4
      %s26 = sphi 0, %s28
      %s29 = sphi 0, %s26
      %s30 = sphi 0, %s29
      %s46 = sphi 0, %s30
      %s50 = sphi 0, %s50
      %s52 = sphi 0, %s50
      %s53 = sphi 0, %s52
      %s67 = sphi 0, %s53
      %s71 = sphi 0, %s71
      %s73 = sphi 0, %s71
      %s74 = sphi 0, %s73
      %s88 = sphi 0, %s74
      %s92 = sphi 0, %s92
      %s94 = sphi 0, %s92
      %s95 = sphi 0, %s94
      %s109 = sphi 0, %s95
      %s113 = sphi 0, %s113
      %s115 = sphi 0, %s113
      %s116 = sphi 0, %s115
      %s130 = sphi 0, %s116
      %s134 = sphi 0, %s134
      %s136 = sphi 0, %s134
      %s137 = sphi 0, %s136
      %s151 = sphi 0, %s137
      %s155 = sphi 0, %s155
      %s157 = sphi 0, %s155
      %s158 = sphi 0, %s157
      %s172 = sphi 0, %s158
      %s178 = sphi 0, %s180
      %s181 = sphi 0, %s178
      %s182 = sphi 0, %s181
      %s198 = sphi 0, %s182
    $region4: #{tpu_custom_call.1} parent=1 // loop_header_branch
      %19 = sbr.rel (%p17) target = $region8
    $region5: #{tpu_custom_call.1} parent=1 // loop_body
      %s21 = ssub.s32 %s16, 1
      %s22 = ssub.s32 %s16, 2
      %s23 = sadd.s32 %s16, 1
      %s24 = ssub.s32 %s16, %s23
      %p25 = scmp.eq.s32.totalorder %s24, 0
      %s27 = sadd.s32 %s26, 1
      %s28 = scalar_select %p25, %s26, %s27
      %p31 = pneg %p25
      %p32 = scmp.eq.s32.totalorder %s16, 1
      %p33 = por %p31, %p32
      %p34 = scmp.ne.s32.totalorder %s26, %s29
      %p35 = scmp.eq.s32.totalorder %s16, 0
      %p36 = por %p34, %p35
      %p37 = scmp.ne.s32.totalorder %s26, %s29
      %p38 = scmp.eq.s32.totalorder %s21, 1
      %p39 = por %p37, %p38
      %p40 = scmp.ne.s32.totalorder %s29, %s30
      %p41 = scmp.eq.s32.totalorder %s21, 0
      %p42 = por %p40, %p41
      %p43 = scmp.ne.s32.totalorder %s29, %s30
      %p44 = scmp.eq.s32.totalorder %s22, 1
      %p45 = por %p43, %p44
      %p47 = scmp.ne.s32.totalorder %s30, %s46
      %p48 = scmp.eq.s32.totalorder %s22, 0
      %p49 = por %p47, %p48
      %s51 = sadd.s32 %s50, 1
      %p54 = scmp.eq.s32.totalorder %s16, 1
      %p55 = scmp.ne.s32.totalorder %s50, %s52
      %p56 = scmp.eq.s32.totalorder %s16, 0
      %p57 = por %p55, %p56
      %p58 = scmp.ne.s32.totalorder %s50, %s52
      %p59 = scmp.eq.s32.totalorder %s21, 1
      %p60 = por %p58, %p59
      %p61 = scmp.ne.s32.totalorder %s52, %s53
      %p62 = scmp.eq.s32.totalorder %s21, 0
      %p63 = por %p61, %p62
      %p64 = scmp.ne.s32.totalorder %s52, %s53
      %p65 = scmp.eq.s32.totalorder %s22, 1
      %p66 = por %p64, %p65
      %p68 = scmp.ne.s32.totalorder %s53, %s67
      %p69 = scmp.eq.s32.totalorder %s22, 0
      %p70 = por %p68, %p69
      %s72 = sadd.s32 %s71, 1
      %p75 = scmp.eq.s32.totalorder %s16, 1
      %p76 = scmp.ne.s32.totalorder %s71, %s73
      %p77 = scmp.eq.s32.totalorder %s16, 0
      %p78 = por %p76, %p77
      %p79 = scmp.ne.s32.totalorder %s71, %s73
      %p80 = scmp.eq.s32.totalorder %s21, 1
      %p81 = por %p79, %p80
      %p82 = scmp.ne.s32.totalorder %s73, %s74
      %p83 = scmp.eq.s32.totalorder %s21, 0
      %p84 = por %p82, %p83
      %p85 = scmp.ne.s32.totalorder %s73, %s74
      %p86 = scmp.eq.s32.totalorder %s22, 1
      %p87 = por %p85, %p86
      %p89 = scmp.ne.s32.totalorder %s74, %s88
      %p90 = scmp.eq.s32.totalorder %s22, 0
      %p91 = por %p89, %p90
      %s93 = sadd.s32 %s92, 1
      %p96 = scmp.eq.s32.totalorder %s16, 1
      %p97 = scmp.ne.s32.totalorder %s92, %s94
      %p98 = scmp.eq.s32.totalorder %s16, 0
      %p99 = por %p97, %p98
      %p100 = scmp.ne.s32.totalorder %s92, %s94
      %p101 = scmp.eq.s32.totalorder %s21, 1
      %p102 = por %p100, %p101
      %p103 = scmp.ne.s32.totalorder %s94, %s95
      %p104 = scmp.eq.s32.totalorder %s21, 0
      %p105 = por %p103, %p104
      %p106 = scmp.ne.s32.totalorder %s94, %s95
      %p107 = scmp.eq.s32.totalorder %s22, 1
      %p108 = por %p106, %p107
      %p110 = scmp.ne.s32.totalorder %s95, %s109
      %p111 = scmp.eq.s32.totalorder %s22, 0
      %p112 = por %p110, %p111
      %s114 = sadd.s32 %s113, 1
      %p117 = scmp.eq.s32.totalorder %s16, 1
      %p118 = scmp.ne.s32.totalorder %s113, %s115
      %p119 = scmp.eq.s32.totalorder %s16, 0
      %p120 = por %p118, %p119
      %p121 = scmp.ne.s32.totalorder %s113, %s115
      %p122 = scmp.eq.s32.totalorder %s21, 1
      %p123 = por %p121, %p122
      %p124 = scmp.ne.s32.totalorder %s115, %s116
      %p125 = scmp.eq.s32.totalorder %s21, 0
      %p126 = por %p124, %p125
      %p127 = scmp.ne.s32.totalorder %s115, %s116
      %p128 = scmp.eq.s32.totalorder %s22, 1
      %p129 = por %p127, %p128
      %p131 = scmp.ne.s32.totalorder %s116, %s130
      %p132 = scmp.eq.s32.totalorder %s22, 0
      %p133 = por %p131, %p132
      %s135 = sadd.s32 %s134, 1
      %p138 = scmp.eq.s32.totalorder %s16, 1
      %p139 = scmp.ne.s32.totalorder %s134, %s136
      %p140 = scmp.eq.s32.totalorder %s16, 0
      %p141 = por %p139, %p140
      %p142 = scmp.ne.s32.totalorder %s134, %s136
      %p143 = scmp.eq.s32.totalorder %s21, 1
      %p144 = por %p142, %p143
      %p145 = scmp.ne.s32.totalorder %s136, %s137
      %p146 = scmp.eq.s32.totalorder %s21, 0
      %p147 = por %p145, %p146
      %p148 = scmp.ne.s32.totalorder %s136, %s137
      %p149 = scmp.eq.s32.totalorder %s22, 1
      %p150 = por %p148, %p149
      %p152 = scmp.ne.s32.totalorder %s137, %s151
      %p153 = scmp.eq.s32.totalorder %s22, 0
      %p154 = por %p152, %p153
      %s156 = sadd.s32 %s155, 1
      %p159 = scmp.eq.s32.totalorder %s16, 1
      %p160 = scmp.ne.s32.totalorder %s155, %s157
      %p161 = scmp.eq.s32.totalorder %s16, 0
      %p162 = por %p160, %p161
      %p163 = scmp.ne.s32.totalorder %s155, %s157
      %p164 = scmp.eq.s32.totalorder %s21, 1
      %p165 = por %p163, %p164
      %p166 = scmp.ne.s32.totalorder %s157, %s158
      %p167 = scmp.eq.s32.totalorder %s21, 0
      %p168 = por %p166, %p167
      %p169 = scmp.ne.s32.totalorder %s157, %s158
      %p170 = scmp.eq.s32.totalorder %s22, 1
      %p171 = por %p169, %p170
      %p173 = scmp.ne.s32.totalorder %s158, %s172
      %p174 = scmp.eq.s32.totalorder %s22, 0
      %p175 = por %p173, %p174
      %s176 = ssub.s32 %s16, %s23
      %p177 = scmp.eq.s32.totalorder %s176, 0
      %s179 = sadd.s32 %s178, 1
      %s180 = scalar_select %p177, %s178, %s179
      %p183 = pneg %p177
      %p184 = scmp.eq.s32.totalorder %s16, 1
      %p185 = por %p183, %p184
      %p186 = scmp.ne.s32.totalorder %s178, %s181
      %p187 = scmp.eq.s32.totalorder %s16, 0
      %p188 = por %p186, %p187
      %p189 = scmp.ne.s32.totalorder %s178, %s181
      %p190 = scmp.eq.s32.totalorder %s21, 1
      %p191 = por %p189, %p190
      %p192 = scmp.ne.s32.totalorder %s181, %s182
      %p193 = scmp.eq.s32.totalorder %s21, 0
      %p194 = por %p192, %p193
      %p195 = scmp.ne.s32.totalorder %s181, %s182
      %p196 = scmp.eq.s32.totalorder %s22, 1
      %p197 = por %p195, %p196
      %p199 = scmp.ne.s32.totalorder %s182, %s198
      %p200 = scmp.eq.s32.totalorder %s22, 0
      %p201 = por %p199, %p200
      %p202 = scmp.le.s32.totalorder 1, %s16
      %p203 = scmp.lt.s32.totalorder %s16, 3
      %p204 = pnand %p202, %p203
      %p205 = pneg %p204
      // Predicated region
      $region9: #{tpu_custom_call.1} parent=5 // pred_check
        _
      $region10: #{tpu_custom_call.1} parent=5 // pred_check_branch
        %207 = sbr.rel (%p204) target = $region12
      $region11: #{tpu_custom_call.1} parent=5 // pred_region
        %s208 = ssub.s32 %s16, 1
        // Predicated region
        $region13: #{tpu_custom_call.1} parent=11 // pred_check
          %p209 = pneg %p63
        $region14: #{tpu_custom_call.1} parent=11 // pred_check_branch
          %211 = sbr.rel (%p209) target = $region16
        $region15: #{tpu_custom_call.1} parent=11 // pred_region
          _
        $region16: #{tpu_custom_call.1} parent=11 // pred_fallthru
          _
        // Predicated region
        $region17: #{tpu_custom_call.1} parent=11 // pred_check
          %p212 = pneg %p84
        $region18: #{tpu_custom_call.1} parent=11 // pred_check_branch
          %214 = sbr.rel (%p212) target = $region20
        $region19: #{tpu_custom_call.1} parent=11 // pred_region
          _
        $region20: #{tpu_custom_call.1} parent=11 // pred_fallthru
          _
        // Predicated region
        $region21: #{tpu_custom_call.1} parent=11 // pred_check
          %p215 = pneg %p105
        $region22: #{tpu_custom_call.1} parent=11 // pred_check_branch
          %217 = sbr.rel (%p215) target = $region24
        $region23: #{tpu_custom_call.1} parent=11 // pred_region
          _
        $region24: #{tpu_custom_call.1} parent=11 // pred_fallthru
          _
        // Predicated region
        $region25: #{tpu_custom_call.1} parent=11 // pred_check
          %p218 = pneg %p126
        $region26: #{tpu_custom_call.1} parent=11 // pred_check_branch
          %220 = sbr.rel (%p218) target = $region28
        $region27: #{tpu_custom_call.1} parent=11 // pred_region
          _
        $region28: #{tpu_custom_call.1} parent=11 // pred_fallthru
          _
        // Predicated region
        $region29: #{tpu_custom_call.1} parent=11 // pred_check
          %p221 = pneg %p147
        $region30: #{tpu_custom_call.1} parent=11 // pred_check_branch
          %223 = sbr.rel (%p221) target = $region32
        $region31: #{tpu_custom_call.1} parent=11 // pred_region
          _
        $region32: #{tpu_custom_call.1} parent=11 // pred_fallthru
          _
        // Predicated region
        $region33: #{tpu_custom_call.1} parent=11 // pred_check
          %p224 = pneg %p168
        $region34: #{tpu_custom_call.1} parent=11 // pred_check_branch
          %226 = sbr.rel (%p224) target = $region36
        $region35: #{tpu_custom_call.1} parent=11 // pred_region
          _
        $region36: #{tpu_custom_call.1} parent=11 // pred_fallthru
          _
      $region12: #{tpu_custom_call.1} parent=5 // pred_fallthru
        _
      %p227 = scmp.lt.s32.totalorder %s16, 2
      // Predicated region
      $region37: #{tpu_custom_call.1} parent=5 // pred_check
        %p228 = pneg %p227
      $region38: #{tpu_custom_call.1} parent=5 // pred_check_branch
        %230 = sbr.rel (%p228) target = $region40
      $region39: #{tpu_custom_call.1} parent=5 // pred_region
        // Predicated region
        $region41: #{tpu_custom_call.1} parent=39 // pred_check
          %p231 = pneg %p36
        $region42: #{tpu_custom_call.1} parent=39 // pred_check_branch
          %233 = sbr.rel (%p231) target = $region44
        $region43: #{tpu_custom_call.1} parent=39 // pred_region
          %s234 = smul.u32 2, %s16
          %p235 = scmp.lt.s32.totalorder %s234, 3
          %s236 = scalar_select %p235, %s234, 3
          %s237 = smul.addr %s236, 8
          %s238 = scalar_lea.vmem %s0, %s237
          %s239 = smul.u32 2, %s16
        $region44: #{tpu_custom_call.1} parent=39 // pred_fallthru
          _
      $region40: #{tpu_custom_call.1} parent=5 // pred_fallthru
        _
      %p240 = scmp.le.s32.totalorder 1, %s16
      %p241 = scmp.lt.s32.totalorder %s16, 3
      %p242 = pnand %p240, %p241
      %p243 = pneg %p242
      // Predicated region
      $region45: #{tpu_custom_call.1} parent=5 // pred_check
        _
      $region46: #{tpu_custom_call.1} parent=5 // pred_check_branch
        %245 = sbr.rel (%p242) target = $region48
      $region47: #{tpu_custom_call.1} parent=5 // pred_region
        %s246 = ssub.s32 %s16, 1
        %s247 = smul.u32 2, %s21
        %p248 = scmp.lt.s32.totalorder %s247, 3
        %s249 = scalar_select %p248, %s247, 3
        %s250 = smul.addr %s249, 8
        %s251 = scalar_lea.vmem %s0, %s250
        %p252 = pneg %p42
        %p253 = pneg %p39
        %p254 = pneg %p63
        %p255 = pneg %p60
        %p256 = pneg %p84
        %p257 = pneg %p81
        %p258 = pneg %p105
        %p259 = pneg %p102
        %p260 = pneg %p126
        %p261 = pneg %p123
        %p262 = pneg %p147
        %p263 = pneg %p144
        %p264 = pneg %p168
        %p265 = pneg %p165
        %p266 = pneg %p194
        %p267 = pneg %p191
        %s268 = sand.u32 %s181, 1
        %s269 = scalar_lea.sflag [#allocation3], %s268
        %s270 = sand.u32 %s181, 1
        %s271 = smul.addr %s270, 16
        %s272 = scalar_lea.vmem [#allocation2], %s271
        %s273 = smul.u32 2, %s21
        %p274 = scmp.lt.s32.totalorder %s273, 3
        %s275 = scalar_select %p274, %s273, 3
        %s276 = smul.addr %s275, 8
        %s277 = scalar_lea.vmem %s0, %s276
        %s278 = smul.u32 2, %s21
        %s279 = smul.u32 2, %s21
        %v281 = vld [vmem:[%s277] sm:$0xff]
        %v282 = vld [vmem:[%s277 + $0x8] sm:$0xff]
        %v283 = vld [vmem:[%s6] sm:$0x7f]
        %vm284 = vcmask 261120
        %v285 = vsel %vm284, %v281, 0.0
        %286 = vadd.xlane.f32.xlu0 %v285
        %v287 = vpop.xlane.xlu0 %286
        %v288 = vsel %vm284, %v282, 0.0
        %289 = vadd.xlane.f32.xlu0 %v288
        %v290 = vpop.xlane.xlu0 %289
        %v291 = vrcp.pop 32.0
        %v292 = vmul.f32 %v287, %v291
        %v293 = vmul.f32 %v290, %v291
        %v294 = vsub.f32 %v281, %v292
        %v295 = vsub.f32 %v282, %v293
        %v296 = vmul.f32 %v294, %v294
        %v297 = vmul.f32 %v295, %v295
        %v298 = vsel %vm284, %v296, 0.0
        %299 = vadd.xlane.f32.xlu0 %v298
        %v300 = vpop.xlane.xlu0 %299
        %v301 = vsel %vm284, %v297, 0.0
        %302 = vadd.xlane.f32.xlu0 %v301
        %v303 = vpop.xlane.xlu0 %302
        %v304 = vmul.f32 %v300, %v291
        %v305 = vmul.f32 %v303, %v291
        %v306 = vadd.f32 %v304, 1e-05
        %v307 = vadd.f32 %v305, 1e-05
        %v308 = vrsqrt.pop %v306
        %v309 = vrsqrt.pop %v307
        %v310 = vmul.f32 %v294, %v308
        %v311 = vmul.f32 %v295, %v309
        %v312 = vlaneseq
        %v313 = vshrl.u32 %v312, 7
        %v314 = vsub.s32 0, %v313
        %v315 = vrot.slane %v283, %v314
        %v316 = vmul.f32 %v310, %v315
        %v317 = vmul.f32 %v311, %v315
        %v318 = vlaneseq
        %v319 = vshrl.u32 %v318, 7
        %v320 = vsub.s32 1, %v319
        %v321 = vrot.slane %v283, %v320
        %v322 = vadd.f32 %v316, %v321
        %v323 = vadd.f32 %v317, %v321
        %v324 = vpack.c.bf16 %v323, %v322
        %v325 = vld [vmem:[%s2] sm:$0xff]
        %v326 = vld [vmem:[%s2 + $0x8] sm:$0xff]
        %v327 = vld [vmem:[%s2 + $0x10] sm:$0xff]
        %v328 = vld [vmem:[%s2 + $0x18] sm:$0xff]
        %v329 = vld [vmem:[%s2 + $0x20] sm:$0xff]
        %v330 = vld [vmem:[%s2 + $0x28] sm:$0xff]
        %v331 = vld [vmem:[%s2 + $0x30] sm:$0xff]
        %v332 = vld [vmem:[%s2 + $0x38] sm:$0xff]
        %v333 = vld [vmem:[%s2 + $0x40] sm:$0xff]
        %v334 = vld [vmem:[%s2 + $0x48] sm:$0xff]
        %v335 = vld [vmem:[%s2 + $0x50] sm:$0xff]
        %v336 = vld [vmem:[%s2 + $0x58] sm:$0xff]
        %v337 = vld [vmem:[%s2 + $0x60] sm:$0xff]
        %v338 = vld [vmem:[%s2 + $0x68] sm:$0xff]
        %v339 = vld [vmem:[%s2 + $0x70] sm:$0xff]
        %v340 = vld [vmem:[%s2 + $0x78] sm:$0xff]
        %v341 = vld [vmem:[%s2 + $0x80] sm:$0xff]
        %v342 = vld [vmem:[%s2 + $0x88] sm:$0xff]
        %v343 = vld [vmem:[%s2 + $0x90] sm:$0xff]
        %v344 = vld [vmem:[%s2 + $0x98] sm:$0xff]
        %v345 = vld [vmem:[%s2 + $0xa0] sm:$0xff]
        %v346 = vld [vmem:[%s2 + $0xa8] sm:$0xff]
        %v347 = vld [vmem:[%s2 + $0xb0] sm:$0xff]
        %v348 = vld [vmem:[%s2 + $0xb8] sm:$0xff]
        %v373 = vunpack.c.l.b16 %v325
        %v374 = vunpack.c.h.b16 %v325
        %v375 = vunpack.c.l.b16 %v326
        %v376 = vunpack.c.h.b16 %v326
        %v377 = vunpack.c.l.b16 %v327
        %v378 = vunpack.c.h.b16 %v327
        %v379 = vunpack.c.l.b16 %v328
        %v380 = vunpack.c.h.b16 %v328
        %v381 = vunpack.c.l.b16 %v329
        %v382 = vunpack.c.h.b16 %v329
        %v383 = vunpack.c.l.b16 %v330
        %v384 = vunpack.c.h.b16 %v330
        %v385 = vunpack.c.l.b16 %v331
        %v386 = vunpack.c.h.b16 %v331
        %v387 = vunpack.c.l.b16 %v332
        %v388 = vunpack.c.h.b16 %v332
        %v389 = vunpack.c.l.b16 %v333
        %v390 = vunpack.c.h.b16 %v333
        %v391 = vunpack.c.l.b16 %v334
        %v392 = vunpack.c.h.b16 %v334
        %v393 = vunpack.c.l.b16 %v335
        %v394 = vunpack.c.h.b16 %v335
        %v395 = vunpack.c.l.b16 %v336
        %v396 = vunpack.c.h.b16 %v336
        %v397 = vunpack.c.l.b16 %v337
        %v398 = vunpack.c.h.b16 %v337
        %v399 = vunpack.c.l.b16 %v338
        %v400 = vunpack.c.h.b16 %v338
        %v401 = vunpack.c.l.b16 %v339
        %v402 = vunpack.c.h.b16 %v339
        %v403 = vunpack.c.l.b16 %v340
        %v404 = vunpack.c.h.b16 %v340
        %v405 = vunpack.c.l.b16 %v341
        %v406 = vunpack.c.h.b16 %v341
        %v407 = vunpack.c.l.b16 %v342
        %v408 = vunpack.c.h.b16 %v342
        %v409 = vunpack.c.l.b16 %v343
        %v410 = vunpack.c.h.b16 %v343
        %v411 = vunpack.c.l.b16 %v344
        %v412 = vunpack.c.h.b16 %v344
        %v413 = vunpack.c.l.b16 %v345
        %v414 = vunpack.c.h.b16 %v345
        %v415 = vunpack.c.l.b16 %v346
        %v416 = vunpack.c.h.b16 %v346
        %v417 = vunpack.c.l.b16 %v347
        %v418 = vunpack.c.h.b16 %v347
        %v419 = vunpack.c.l.b16 %v348
        %v420 = vunpack.c.h.b16 %v348
        %v421 = vpack.c.b16 %v385, %v373
        %v422 = vpack.c.b16 %v386, %v374
        %v423 = vpack.c.b16 %v387, %v375
        %v424 = vpack.c.b16 %v388, %v376
        %v425 = vpack.c.b16 %v389, %v377
        %v426 = vpack.c.b16 %v390, %v378
        %v427 = vpack.c.b16 %v391, %v379
        %v428 = vpack.c.b16 %v392, %v380
        %v429 = vpack.c.b16 %v393, %v381
        %v430 = vpack.c.b16 %v394, %v382
        %v431 = vpack.c.b16 %v395, %v383
        %v432 = vpack.c.b16 %v396, %v384
        %v433 = vpack.c.b16 %v409, %v397
        %v434 = vpack.c.b16 %v410, %v398
        %v435 = vpack.c.b16 %v411, %v399
        %v436 = vpack.c.b16 %v412, %v400
        %v437 = vpack.c.b16 %v413, %v401
        %v438 = vpack.c.b16 %v414, %v402
        %v439 = vpack.c.b16 %v415, %v403
        %v440 = vpack.c.b16 %v416, %v404
        %v441 = vpack.c.b16 %v417, %v405
        %v442 = vpack.c.b16 %v418, %v406
        %v443 = vpack.c.b16 %v419, %v407
        %v444 = vpack.c.b16 %v420, %v408
        %v470 = vsel %vm284, %v324, 0
        %472 = vmatprep.subr.bf16.mxu0 %v422
        %473 = vmatpush1.bf16.msra.mxu0 %v421
        %474 = vmatprep.subr.bf16.mxu0 %v434
        %475 = vmatpush1.bf16.msra.mxu0 %v433
        %476 = vmatprep.subr.bf16.mxu0 0
        %477 = vmatpush1.bf16.msra.mxu0 0
        %478 = vmatprep.subr.bf16.mxu0 0
        %479 = vmatpush1.bf16.msra.mxu0 0
        %480 = vmatprep.subr.bf16.mxu0 0
        %481 = vmatpush1.bf16.msra.mxu0 0
        %482 = vmatprep.subr.bf16.mxu0 0
        %483 = vmatpush1.bf16.msra.mxu0 0
        %484 = vmatprep.subr.bf16.mxu0 0
        %485 = vmatpush1.bf16.msra.mxu0 0
        %486 = vmatprep.subr.bf16.mxu0 0
        %487 = vmatpush1.bf16.msra.mxu0 0
        %488 = vmatprep.subr.bf16.mxu0 0
        %489 = vmatpush1.bf16.msra.mxu0 0
        %490 = vmatprep.subr.bf16.mxu0 0
        %491 = vmatpush1.bf16.msra.mxu0 0
        %492 = vmatprep.subr.bf16.mxu0 0
        %493 = vmatpush1.bf16.msra.mxu0 0
        %494 = vmatprep.subr.bf16.mxu0 0
        %495 = vmatpush1.bf16.msra.mxu0 0
        %496 = vmatprep.subr.bf16.mxu0 0
        %497 = vmatpush1.bf16.msra.mxu0 0
        %498 = vmatprep.subr.bf16.mxu0 0
        %499 = vmatpush1.bf16.msra.mxu0 0
        %500 = vmatprep.subr.bf16.mxu0 0
        %501 = vmatpush1.bf16.msra.mxu0 0
        %502 = vmatprep.subr.bf16.mxu0 0
        %503 = vmatpush1.bf16.msra.mxu0 0
        %504 = vmatprep.mubr.bf16.mxu0 0
        %505 = vmatmul.mubr.bf16.gmra.mrb[0].mxu0 %v470
        %v506 = vpop.f32.mrb[0].mxu0
        %v507 = vadd.f32 0.0, %v506
        %v508 = vpop.f32.mrb[0].mxu0
        %v509 = vadd.f32 0.0, %v508
        %v510 = vpop.f32.mrb[0].mxu0
        %v511 = vadd.f32 0.0, %v510
        %v512 = vpop.f32.mrb[0].mxu0
        %v513 = vadd.f32 0.0, %v512
        %514 = vdwg.mxu0
        %515 = vmatprep.subr.bf16.mxu0 %v424
        %516 = vmatpush1.bf16.msra.mxu0 %v423
        %517 = vmatprep.subr.bf16.mxu0 %v436
        %518 = vmatpush1.bf16.msra.mxu0 %v435
        %519 = vmatprep.subr.bf16.mxu0 0
        %520 = vmatpush1.bf16.msra.mxu0 0
        %521 = vmatprep.subr.bf16.mxu0 0
        %522 = vmatpush1.bf16.msra.mxu0 0
        %523 = vmatprep.subr.bf16.mxu0 0
        %524 = vmatpush1.bf16.msra.mxu0 0
        %525 = vmatprep.subr.bf16.mxu0 0
        %526 = vmatpush1.bf16.msra.mxu0 0
        %527 = vmatprep.subr.bf16.mxu0 0
        %528 = vmatpush1.bf16.msra.mxu0 0
        %529 = vmatprep.subr.bf16.mxu0 0
        %530 = vmatpush1.bf16.msra.mxu0 0
        %531 = vmatprep.subr.bf16.mxu0 0
        %532 = vmatpush1.bf16.msra.mxu0 0
        %533 = vmatprep.subr.bf16.mxu0 0
        %534 = vmatpush1.bf16.msra.mxu0 0
        %535 = vmatprep.subr.bf16.mxu0 0
        %536 = vmatpush1.bf16.msra.mxu0 0
        %537 = vmatprep.subr.bf16.mxu0 0
        %538 = vmatpush1.bf16.msra.mxu0 0
        %539 = vmatprep.subr.bf16.mxu0 0
        %540 = vmatpush1.bf16.msra.mxu0 0
        %541 = vmatprep.subr.bf16.mxu0 0
        %542 = vmatpush1.bf16.msra.mxu0 0
        %543 = vmatprep.subr.bf16.mxu0 0
        %544 = vmatpush1.bf16.msra.mxu0 0
        %545 = vmatprep.subr.bf16.mxu0 0
        %546 = vmatpush1.bf16.msra.mxu0 0
        %547 = vmatprep.mubr.bf16.mxu0 0
        %548 = vmatmul.mubr.bf16.gmra.mrb[0].mxu0 %v470
        %v549 = vpop.f32.mrb[0].mxu0
        %v550 = vadd.f32 0.0, %v549
        %v551 = vpop.f32.mrb[0].mxu0
        %v552 = vadd.f32 0.0, %v551
        %v553 = vpop.f32.mrb[0].mxu0
        %v554 = vadd.f32 0.0, %v553
        %v555 = vpop.f32.mrb[0].mxu0
        %v556 = vadd.f32 0.0, %v555
        %557 = vdwg.mxu0
        %558 = vmatprep.subr.bf16.mxu0 %v426
        %559 = vmatpush1.bf16.msra.mxu0 %v425
        %560 = vmatprep.subr.bf16.mxu0 %v438
        %561 = vmatpush1.bf16.msra.mxu0 %v437
        %562 = vmatprep.subr.bf16.mxu0 0
        %563 = vmatpush1.bf16.msra.mxu0 0
        %564 = vmatprep.subr.bf16.mxu0 0
        %565 = vmatpush1.bf16.msra.mxu0 0
        %566 = vmatprep.subr.bf16.mxu0 0
        %567 = vmatpush1.bf16.msra.mxu0 0
        %568 = vmatprep.subr.bf16.mxu0 0
        %569 = vmatpush1.bf16.msra.mxu0 0
        %570 = vmatprep.subr.bf16.mxu0 0
        %571 = vmatpush1.bf16.msra.mxu0 0
        %572 = vmatprep.subr.bf16.mxu0 0
        %573 = vmatpush1.bf16.msra.mxu0 0
        %574 = vmatprep.subr.bf16.mxu0 0
        %575 = vmatpush1.bf16.msra.mxu0 0
        %576 = vmatprep.subr.bf16.mxu0 0
        %577 = vmatpush1.bf16.msra.mxu0 0
        %578 = vmatprep.subr.bf16.mxu0 0
        %579 = vmatpush1.bf16.msra.mxu0 0
        %580 = vmatprep.subr.bf16.mxu0 0
        %581 = vmatpush1.bf16.msra.mxu0 0
        %582 = vmatprep.subr.bf16.mxu0 0
        %583 = vmatpush1.bf16.msra.mxu0 0
        %584 = vmatprep.subr.bf16.mxu0 0
        %585 = vmatpush1.bf16.msra.mxu0 0
        %586 = vmatprep.subr.bf16.mxu0 0
        %587 = vmatpush1.bf16.msra.mxu0 0
        %588 = vmatprep.subr.bf16.mxu0 0
        %589 = vmatpush1.bf16.msra.mxu0 0
        %590 = vmatprep.mubr.bf16.mxu0 0
        %591 = vmatmul.mubr.bf16.gmra.mrb[0].mxu0 %v470
        %v592 = vpop.f32.mrb[0].mxu0
        %v593 = vadd.f32 0.0, %v592
        %v594 = vpop.f32.mrb[0].mxu0
        %v595 = vadd.f32 0.0, %v594
        %v596 = vpop.f32.mrb[0].mxu0
        %v597 = vadd.f32 0.0, %v596
        %v598 = vpop.f32.mrb[0].mxu0
        %v599 = vadd.f32 0.0, %v598
        %600 = vdwg.mxu0
        %601 = vmatprep.subr.bf16.mxu0 %v428
        %602 = vmatpush1.bf16.msra.mxu0 %v427
        %603 = vmatprep.subr.bf16.mxu0 %v440
        %604 = vmatpush1.bf16.msra.mxu0 %v439
        %605 = vmatprep.subr.bf16.mxu0 0
        %606 = vmatpush1.bf16.msra.mxu0 0
        %607 = vmatprep.subr.bf16.mxu0 0
        %608 = vmatpush1.bf16.msra.mxu0 0
        %609 = vmatprep.subr.bf16.mxu0 0
        %610 = vmatpush1.bf16.msra.mxu0 0
        %611 = vmatprep.subr.bf16.mxu0 0
        %612 = vmatpush1.bf16.msra.mxu0 0
        %613 = vmatprep.subr.bf16.mxu0 0
        %614 = vmatpush1.bf16.msra.mxu0 0
        %615 = vmatprep.subr.bf16.mxu0 0
        %616 = vmatpush1.bf16.msra.mxu0 0
        %617 = vmatprep.subr.bf16.mxu0 0
        %618 = vmatpush1.bf16.msra.mxu0 0
        %619 = vmatprep.subr.bf16.mxu0 0
        %620 = vmatpush1.bf16.msra.mxu0 0
        %621 = vmatprep.subr.bf16.mxu0 0
        %622 = vmatpush1.bf16.msra.mxu0 0
        %623 = vmatprep.subr.bf16.mxu0 0
        %624 = vmatpush1.bf16.msra.mxu0 0
        %625 = vmatprep.subr.bf16.mxu0 0
        %626 = vmatpush1.bf16.msra.mxu0 0
        %627 = vmatprep.subr.bf16.mxu0 0
        %628 = vmatpush1.bf16.msra.mxu0 0
        %629 = vmatprep.subr.bf16.mxu0 0
        %630 = vmatpush1.bf16.msra.mxu0 0
        %631 = vmatprep.subr.bf16.mxu0 0
        %632 = vmatpush1.bf16.msra.mxu0 0
        %633 = vmatprep.mubr.bf16.mxu0 0
        %634 = vmatmul.mubr.bf16.gmra.mrb[0].mxu0 %v470
        %v635 = vpop.f32.mrb[0].mxu0
        %v636 = vadd.f32 0.0, %v635
        %v637 = vpop.f32.mrb[0].mxu0
        %v638 = vadd.f32 0.0, %v637
        %v639 = vpop.f32.mrb[0].mxu0
        %v640 = vadd.f32 0.0, %v639
        %v641 = vpop.f32.mrb[0].mxu0
        %v642 = vadd.f32 0.0, %v641
        %643 = vdwg.mxu0
        %644 = vmatprep.subr.bf16.mxu0 %v430
        %645 = vmatpush1.bf16.msra.mxu0 %v429
        %646 = vmatprep.subr.bf16.mxu0 %v442
        %647 = vmatpush1.bf16.msra.mxu0 %v441
        %648 = vmatprep.subr.bf16.mxu0 0
        %649 = vmatpush1.bf16.msra.mxu0 0
        %650 = vmatprep.subr.bf16.mxu0 0
        %651 = vmatpush1.bf16.msra.mxu0 0
        %652 = vmatprep.subr.bf16.mxu0 0
        %653 = vmatpush1.bf16.msra.mxu0 0
        %654 = vmatprep.subr.bf16.mxu0 0
        %655 = vmatpush1.bf16.msra.mxu0 0
        %656 = vmatprep.subr.bf16.mxu0 0
        %657 = vmatpush1.bf16.msra.mxu0 0
        %658 = vmatprep.subr.bf16.mxu0 0
        %659 = vmatpush1.bf16.msra.mxu0 0
        %660 = vmatprep.subr.bf16.mxu0 0
        %661 = vmatpush1.bf16.msra.mxu0 0
        %662 = vmatprep.subr.bf16.mxu0 0
        %663 = vmatpush1.bf16.msra.mxu0 0
        %664 = vmatprep.subr.bf16.mxu0 0
        %665 = vmatpush1.bf16.msra.mxu0 0
        %666 = vmatprep.subr.bf16.mxu0 0
        %667 = vmatpush1.bf16.msra.mxu0 0
        %668 = vmatprep.subr.bf16.mxu0 0
        %669 = vmatpush1.bf16.msra.mxu0 0
        %670 = vmatprep.subr.bf16.mxu0 0
        %671 = vmatpush1.bf16.msra.mxu0 0
        %672 = vmatprep.subr.bf16.mxu0 0
        %673 = vmatpush1.bf16.msra.mxu0 0
        %674 = vmatprep.subr.bf16.mxu0 0
        %675 = vmatpush1.bf16.msra.mxu0 0
        %676 = vmatprep.mubr.bf16.mxu0 0
        %677 = vmatmul.mubr.bf16.gmra.mrb[0].mxu0 %v470
        %v678 = vpop.f32.mrb[0].mxu0
        %v679 = vadd.f32 0.0, %v678
        %v680 = vpop.f32.mrb[0].mxu0
        %v681 = vadd.f32 0.0, %v680
        %v682 = vpop.f32.mrb[0].mxu0
        %v683 = vadd.f32 0.0, %v682
        %v684 = vpop.f32.mrb[0].mxu0
        %v685 = vadd.f32 0.0, %v684
        %686 = vdwg.mxu0
        %687 = vmatprep.subr.bf16.mxu0 %v432
        %688 = vmatpush1.bf16.msra.mxu0 %v431
        %689 = vmatprep.subr.bf16.mxu0 %v444
        %690 = vmatpush1.bf16.msra.mxu0 %v443
        %691 = vmatprep.subr.bf16.mxu0 0
        %692 = vmatpush1.bf16.msra.mxu0 0
        %693 = vmatprep.subr.bf16.mxu0 0
        %694 = vmatpush1.bf16.msra.mxu0 0
        %695 = vmatprep.subr.bf16.mxu0 0
        %696 = vmatpush1.bf16.msra.mxu0 0
        %697 = vmatprep.subr.bf16.mxu0 0
        %698 = vmatpush1.bf16.msra.mxu0 0
        %699 = vmatprep.subr.bf16.mxu0 0
        %700 = vmatpush1.bf16.msra.mxu0 0
        %701 = vmatprep.subr.bf16.mxu0 0
        %702 = vmatpush1.bf16.msra.mxu0 0
        %703 = vmatprep.subr.bf16.mxu0 0
        %704 = vmatpush1.bf16.msra.mxu0 0
        %705 = vmatprep.subr.bf16.mxu0 0
        %706 = vmatpush1.bf16.msra.mxu0 0
        %707 = vmatprep.subr.bf16.mxu0 0
        %708 = vmatpush1.bf16.msra.mxu0 0
        %709 = vmatprep.subr.bf16.mxu0 0
        %710 = vmatpush1.bf16.msra.mxu0 0
        %711 = vmatprep.subr.bf16.mxu0 0
        %712 = vmatpush1.bf16.msra.mxu0 0
        %713 = vmatprep.subr.bf16.mxu0 0
        %714 = vmatpush1.bf16.msra.mxu0 0
        %715 = vmatprep.subr.bf16.mxu0 0
        %716 = vmatpush1.bf16.msra.mxu0 0
        %717 = vmatprep.subr.bf16.mxu0 0
        %718 = vmatpush1.bf16.msra.mxu0 0
        %719 = vmatprep.mubr.bf16.mxu0 0
        %720 = vmatmul.mubr.bf16.gmra.mrb[0].mxu0 %v470
        %v721 = vpop.f32.mrb[0].mxu0
        %v722 = vadd.f32 0.0, %v721
        %v723 = vpop.f32.mrb[0].mxu0
        %v724 = vadd.f32 0.0, %v723
        %v725 = vpop.f32.mrb[0].mxu0
        %v726 = vadd.f32 0.0, %v725
        %v727 = vpop.f32.mrb[0].mxu0
        %v728 = vadd.f32 0.0, %v727
        %729 = vdwg.mxu0
        %v730 = vld [vmem:[%s1] sm:$0xff]
        %v731 = vpack.c.bf16 %v507, %v507
        %v732 = vpack.c.bf16 %v511, %v511
        %v733 = vpack.c.bf16 %v593, %v593
        %v734 = vpack.c.bf16 %v597, %v597
        %v735 = vpack.c.bf16 %v679, %v679
        %v736 = vpack.c.bf16 %v683, %v683
        %737 = vmatprep.subr.bf16.mxu0 0
        %738 = vmatpush1.bf16.xpose.msra.mxu0 %v733
        %739 = vmatprep.subr.bf16.mxu0 0
        %740 = vmatpush1.bf16.xpose.msra.mxu0 0
        %741 = vmatprep.subr.bf16.mxu0 0
        %742 = vmatpush1.bf16.xpose.msra.mxu0 0
        %743 = vmatprep.subr.bf16.mxu0 0
        %744 = vmatpush1.bf16.xpose.msra.mxu0 0
        %745 = vmatprep.subr.bf16.mxu0 0
        %746 = vmatpush1.bf16.xpose.msra.mxu0 0
        %747 = vmatprep.subr.bf16.mxu0 0
        %748 = vmatpush1.bf16.xpose.msra.mxu0 0
        %749 = vmatprep.subr.bf16.mxu0 0
        %750 = vmatpush1.bf16.xpose.msra.mxu0 0
        %751 = vmatprep.subr.bf16.mxu0 0
        %752 = vmatpush1.bf16.xpose.msra.mxu0 0
        %753 = vmatprep.subr.bf16.mxu0 0
        %754 = vmatpush1.bf16.xpose.msra.mxu0 0
        %755 = vmatprep.subr.bf16.mxu0 0
        %756 = vmatpush1.bf16.xpose.msra.mxu0 0
        %757 = vmatprep.subr.bf16.mxu0 0
        %758 = vmatpush1.bf16.xpose.msra.mxu0 0
        %759 = vmatprep.subr.bf16.mxu0 0
        %760 = vmatpush1.bf16.xpose.msra.mxu0 0
        %761 = vmatprep.subr.bf16.mxu0 0
        %762 = vmatpush1.bf16.xpose.msra.mxu0 0
        %763 = vmatprep.subr.bf16.mxu0 0
        %764 = vmatpush1.bf16.xpose.msra.mxu0 0
        %765 = vmatprep.subr.bf16.mxu0 0
        %766 = vmatpush1.bf16.xpose.msra.mxu0 0
        %767 = vmatprep.subr.bf16.mxu0 0
        %768 = vmatpush1.bf16.xpose.msra.mxu0 0
        %769 = vmatprep.mubr.bf16.mxu0 0
        %770 = vmatmul.mubr.bf16.gmra.mrb[0].mxu0 %v731
        %v771 = vpop.f32.mrb[0].mxu0
        %v772 = vadd.f32 %v730, %v771
        %v773 = vpop.f32.mrb[0].mxu0
        %v774 = vpop.f32.mrb[0].mxu0
        %v775 = vpop.f32.mrb[0].mxu0
        %776 = vdwg.mxu0
        %777 = vmatprep.subr.bf16.mxu0 0
        %778 = vmatpush1.bf16.xpose.msra.mxu0 %v734
        %779 = vmatprep.subr.bf16.mxu0 0
        %780 = vmatpush1.bf16.xpose.msra.mxu0 0
        %781 = vmatprep.subr.bf16.mxu0 0
        %782 = vmatpush1.bf16.xpose.msra.mxu0 0
        %783 = vmatprep.subr.bf16.mxu0 0
        %784 = vmatpush1.bf16.xpose.msra.mxu0 0
        %785 = vmatprep.subr.bf16.mxu0 0
        %786 = vmatpush1.bf16.xpose.msra.mxu0 0
        %787 = vmatprep.subr.bf16.mxu0 0
        %788 = vmatpush1.bf16.xpose.msra.mxu0 0
        %789 = vmatprep.subr.bf16.mxu0 0
        %790 = vmatpush1.bf16.xpose.msra.mxu0 0
        %791 = vmatprep.subr.bf16.mxu0 0
        %792 = vmatpush1.bf16.xpose.msra.mxu0 0
        %793 = vmatprep.subr.bf16.mxu0 0
        %794 = vmatpush1.bf16.xpose.msra.mxu0 0
        %795 = vmatprep.subr.bf16.mxu0 0
        %796 = vmatpush1.bf16.xpose.msra.mxu0 0
        %797 = vmatprep.subr.bf16.mxu0 0
        %798 = vmatpush1.bf16.xpose.msra.mxu0 0
        %799 = vmatprep.subr.bf16.mxu0 0
        %800 = vmatpush1.bf16.xpose.msra.mxu0 0
        %801 = vmatprep.subr.bf16.mxu0 0
        %802 = vmatpush1.bf16.xpose.msra.mxu0 0
        %803 = vmatprep.subr.bf16.mxu0 0
        %804 = vmatpush1.bf16.xpose.msra.mxu0 0
        %805 = vmatprep.subr.bf16.mxu0 0
        %806 = vmatpush1.bf16.xpose.msra.mxu0 0
        %807 = vmatprep.subr.bf16.mxu0 0
        %808 = vmatpush1.bf16.xpose.msra.mxu0 0
        %809 = vmatprep.mubr.bf16.mxu0 0
        %810 = vmatmul.mubr.bf16.gmra.mrb[0].mxu0 %v732
        %v811 = vpop.f32.mrb[0].mxu0
        %v812 = vadd.f32 %v730, %v811
        %v813 = vpop.f32.mrb[0].mxu0
        %v814 = vpop.f32.mrb[0].mxu0
        %v815 = vpop.f32.mrb[0].mxu0
        %816 = vdwg.mxu0
        %vm817 = vcmask 64512
        %v818 = vsel %vm817, %v772, -inf
        %819 = vmax.xlane.f32.xlu0 %v818
        %v820 = vpop.xlane.xlu0 %819
        %v821 = vsel %vm817, %v812, -inf
        %822 = vmax.xlane.f32.xlu0 %v821
        %v823 = vpop.xlane.xlu0 %822
        %v824 = vsub.f32 %v772, %v820
        %v825 = vsub.f32 %v812, %v823
        %v826 = vmul.f32 %v824, 1.442695
        %v827 = vpow.pop %v826
        %v828 = vmul.f32 %v825, 1.442695
        %v829 = vpow.pop %v828
        %v830 = vsel %vm817, %v827, 0.0
        %831 = vadd.xlane.f32.xlu0 %v830
        %v832 = vpop.xlane.xlu0 %831
        %v833 = vsel %vm817, %v829, 0.0
        %834 = vadd.xlane.f32.xlu0 %v833
        %v835 = vpop.xlane.xlu0 %834
        %v836 = vpack.c.bf16 %v827, %v827
        %v837 = vpack.c.bf16 %v829, %v829
        %v839 = vsel %vm817, %v836, 0
        %vm841 = vcmask 1043456
        %v843 = vsel %vm841, %v735, 0
        %845 = vmatprep.subr.bf16.mxu0 0
        %846 = vmatpush1.bf16.msra.mxu0 %v843
        %847 = vmatprep.subr.bf16.mxu0 0
        %848 = vmatpush1.bf16.msra.mxu0 0
        %849 = vmatprep.subr.bf16.mxu0 0
        %850 = vmatpush1.bf16.msra.mxu0 0
        %851 = vmatprep.subr.bf16.mxu0 0
        %852 = vmatpush1.bf16.msra.mxu0 0
        %853 = vmatprep.subr.bf16.mxu0 0
        %854 = vmatpush1.bf16.msra.mxu0 0
        %855 = vmatprep.subr.bf16.mxu0 0
        %856 = vmatpush1.bf16.msra.mxu0 0
        %857 = vmatprep.subr.bf16.mxu0 0
        %858 = vmatpush1.bf16.msra.mxu0 0
        %859 = vmatprep.subr.bf16.mxu0 0
        %860 = vmatpush1.bf16.msra.mxu0 0
        %861 = vmatprep.subr.bf16.mxu0 0
        %862 = vmatpush1.bf16.msra.mxu0 0
        %863 = vmatprep.subr.bf16.mxu0 0
        %864 = vmatpush1.bf16.msra.mxu0 0
        %865 = vmatprep.subr.bf16.mxu0 0
        %866 = vmatpush1.bf16.msra.mxu0 0
        %867 = vmatprep.subr.bf16.mxu0 0
        %868 = vmatpush1.bf16.msra.mxu0 0
        %869 = vmatprep.subr.bf16.mxu0 0
        %870 = vmatpush1.bf16.msra.mxu0 0
        %871 = vmatprep.subr.bf16.mxu0 0
        %872 = vmatpush1.bf16.msra.mxu0 0
        %873 = vmatprep.subr.bf16.mxu0 0
        %874 = vmatpush1.bf16.msra.mxu0 0
        %875 = vmatprep.subr.bf16.mxu0 0
        %876 = vmatpush1.bf16.msra.mxu0 0
        %877 = vmatprep.mubr.bf16.mxu0 0
        %878 = vmatmul.mubr.bf16.gmra.mrb[0].mxu0 %v839
        %v879 = vpop.f32.mrb[0].mxu0
        %v880 = vadd.f32 0.0, %v879
        %v881 = vpop.f32.mrb[0].mxu0
        %v882 = vpop.f32.mrb[0].mxu0
        %v883 = vpop.f32.mrb[0].mxu0
        %884 = vdwg.mxu0
        %v886 = vsel %vm817, %v837, 0
        %v889 = vsel %vm841, %v736, 0
        %891 = vmatprep.subr.bf16.mxu0 0
        %892 = vmatpush1.bf16.msra.mxu0 %v889
        %893 = vmatprep.subr.bf16.mxu0 0
        %894 = vmatpush1.bf16.msra.mxu0 0
        %895 = vmatprep.subr.bf16.mxu0 0
        %896 = vmatpush1.bf16.msra.mxu0 0
        %897 = vmatprep.subr.bf16.mxu0 0
        %898 = vmatpush1.bf16.msra.mxu0 0
        %899 = vmatprep.subr.bf16.mxu0 0
        %900 = vmatpush1.bf16.msra.mxu0 0
        %901 = vmatprep.subr.bf16.mxu0 0
        %902 = vmatpush1.bf16.msra.mxu0 0
        %903 = vmatprep.subr.bf16.mxu0 0
        %904 = vmatpush1.bf16.msra.mxu0 0
        %905 = vmatprep.subr.bf16.mxu0 0
        %906 = vmatpush1.bf16.msra.mxu0 0
        %907 = vmatprep.subr.bf16.mxu0 0
        %908 = vmatpush1.bf16.msra.mxu0 0
        %909 = vmatprep.subr.bf16.mxu0 0
        %910 = vmatpush1.bf16.msra.mxu0 0
        %911 = vmatprep.subr.bf16.mxu0 0
        %912 = vmatpush1.bf16.msra.mxu0 0
        %913 = vmatprep.subr.bf16.mxu0 0
        %914 = vmatpush1.bf16.msra.mxu0 0
        %915 = vmatprep.subr.bf16.mxu0 0
        %916 = vmatpush1.bf16.msra.mxu0 0
        %917 = vmatprep.subr.bf16.mxu0 0
        %918 = vmatpush1.bf16.msra.mxu0 0
        %919 = vmatprep.subr.bf16.mxu0 0
        %920 = vmatpush1.bf16.msra.mxu0 0
        %921 = vmatprep.subr.bf16.mxu0 0
        %922 = vmatpush1.bf16.msra.mxu0 0
        %923 = vmatprep.mubr.bf16.mxu0 0
        %924 = vmatmul.mubr.bf16.gmra.mrb[0].mxu0 %v886
        %v925 = vpop.f32.mrb[0].mxu0
        %v926 = vadd.f32 0.0, %v925
        %v927 = vpop.f32.mrb[0].mxu0
        %v928 = vpop.f32.mrb[0].mxu0
        %v929 = vpop.f32.mrb[0].mxu0
        %930 = vdwg.mxu0
        %v931 = vrcp.pop %v832
        %v932 = vrcp.pop %v835
        %v933 = vmul.f32 %v880, %v931
        %v934 = vmul.f32 %v926, %v932
        %v935 = vpack.c.bf16 %v509, %v509
        %v936 = vpack.c.bf16 %v513, %v513
        %v937 = vpack.c.bf16 %v595, %v595
        %v938 = vpack.c.bf16 %v599, %v599
        %v939 = vpack.c.bf16 %v681, %v681
        %v940 = vpack.c.bf16 %v685, %v685
        %941 = vmatprep.subr.bf16.mxu0 0
        %942 = vmatpush1.bf16.xpose.msra.mxu0 %v937
        %943 = vmatprep.subr.bf16.mxu0 0
        %944 = vmatpush1.bf16.xpose.msra.mxu0 0
        %945 = vmatprep.subr.bf16.mxu0 0
        %946 = vmatpush1.bf16.xpose.msra.mxu0 0
        %947 = vmatprep.subr.bf16.mxu0 0
        %948 = vmatpush1.bf16.xpose.msra.mxu0 0
        %949 = vmatprep.subr.bf16.mxu0 0
        %950 = vmatpush1.bf16.xpose.msra.mxu0 0
        %951 = vmatprep.subr.bf16.mxu0 0
        %952 = vmatpush1.bf16.xpose.msra.mxu0 0
        %953 = vmatprep.subr.bf16.mxu0 0
        %954 = vmatpush1.bf16.xpose.msra.mxu0 0
        %955 = vmatprep.subr.bf16.mxu0 0
        %956 = vmatpush1.bf16.xpose.msra.mxu0 0
        %957 = vmatprep.subr.bf16.mxu0 0
        %958 = vmatpush1.bf16.xpose.msra.mxu0 0
        %959 = vmatprep.subr.bf16.mxu0 0
        %960 = vmatpush1.bf16.xpose.msra.mxu0 0
        %961 = vmatprep.subr.bf16.mxu0 0
        %962 = vmatpush1.bf16.xpose.msra.mxu0 0
        %963 = vmatprep.subr.bf16.mxu0 0
        %964 = vmatpush1.bf16.xpose.msra.mxu0 0
        %965 = vmatprep.subr.bf16.mxu0 0
        %966 = vmatpush1.bf16.xpose.msra.mxu0 0
        %967 = vmatprep.subr.bf16.mxu0 0
        %968 = vmatpush1.bf16.xpose.msra.mxu0 0
        %969 = vmatprep.subr.bf16.mxu0 0
        %970 = vmatpush1.bf16.xpose.msra.mxu0 0
        %971 = vmatprep.subr.bf16.mxu0 0
        %972 = vmatpush1.bf16.xpose.msra.mxu0 0
        %973 = vmatprep.mubr.bf16.mxu0 0
        %974 = vmatmul.mubr.bf16.gmra.mrb[0].mxu0 %v935
        %v975 = vpop.f32.mrb[0].mxu0
        %v976 = vadd.f32 %v730, %v975
        %v977 = vpop.f32.mrb[0].mxu0
        %v978 = vpop.f32.mrb[0].mxu0
        %v979 = vpop.f32.mrb[0].mxu0
        %980 = vdwg.mxu0
        %981 = vmatprep.subr.bf16.mxu0 0
        %982 = vmatpush1.bf16.xpose.msra.mxu0 %v938
        %983 = vmatprep.subr.bf16.mxu0 0
        %984 = vmatpush1.bf16.xpose.msra.mxu0 0
        %985 = vmatprep.subr.bf16.mxu0 0
        %986 = vmatpush1.bf16.xpose.msra.mxu0 0
        %987 = vmatprep.subr.bf16.mxu0 0
        %988 = vmatpush1.bf16.xpose.msra.mxu0 0
        %989 = vmatprep.subr.bf16.mxu0 0
        %990 = vmatpush1.bf16.xpose.msra.mxu0 0
        %991 = vmatprep.subr.bf16.mxu0 0
        %992 = vmatpush1.bf16.xpose.msra.mxu0 0
        %993 = vmatprep.subr.bf16.mxu0 0
        %994 = vmatpush1.bf16.xpose.msra.mxu0 0
        %995 = vmatprep.subr.bf16.mxu0 0
        %996 = vmatpush1.bf16.xpose.msra.mxu0 0
        %997 = vmatprep.subr.bf16.mxu0 0
        %998 = vmatpush1.bf16.xpose.msra.mxu0 0
        %999 = vmatprep.subr.bf16.mxu0 0
        %1000 = vmatpush1.bf16.xpose.msra.mxu0 0
        %1001 = vmatprep.subr.bf16.mxu0 0
        %1002 = vmatpush1.bf16.xpose.msra.mxu0 0
        %1003 = vmatprep.subr.bf16.mxu0 0
        %1004 = vmatpush1.bf16.xpose.msra.mxu0 0
        %1005 = vmatprep.subr.bf16.mxu0 0
        %1006 = vmatpush1.bf16.xpose.msra.mxu0 0
        %1007 = vmatprep.subr.bf16.mxu0 0
        %1008 = vmatpush1.bf16.xpose.msra.mxu0 0
        %1009 = vmatprep.subr.bf16.mxu0 0
        %1010 = vmatpush1.bf16.xpose.msra.mxu0 0
        %1011 = vmatprep.subr.bf16.mxu0 0
        %1012 = vmatpush1.bf16.xpose.msra.mxu0 0
        %1013 = vmatprep.mubr.bf16.mxu0 0
        %1014 = vmatmul.mubr.bf16.gmra.mrb[0].mxu0 %v936
        %v1015 = vpop.f32.mrb[0].mxu0
        %v1016 = vadd.f32 %v730, %v1015
        %v1017 = vpop.f32.mrb[0].mxu0
        %v1018 = vpop.f32.mrb[0].mxu0
        %v1019 = vpop.f32.mrb[0].mxu0
        %1020 = vdwg.mxu0
        %v1021 = vsel %vm817, %v976, -inf
        %1022 = vmax.xlane.f32.xlu0 %v1021
        %v1023 = vpop.xlane.xlu0 %1022
        %v1024 = vsel %vm817, %v1016, -inf
        %1025 = vmax.xlane.f32.xlu0 %v1024
        %v1026 = vpop.xlane.xlu0 %1025
        %v1027 = vsub.f32 %v976, %v1023
        %v1028 = vsub.f32 %v1016, %v1026
        %v1029 = vmul.f32 %v1027, 1.442695
        %v1030 = vpow.pop %v1029
        %v1031 = vmul.f32 %v1028, 1.442695
        %v1032 = vpow.pop %v1031
        %v1033 = vsel %vm817, %v1030, 0.0
        %1034 = vadd.xlane.f32.xlu0 %v1033
        %v1035 = vpop.xlane.xlu0 %1034
        %v1036 = vsel %vm817, %v1032, 0.0
        %1037 = vadd.xlane.f32.xlu0 %v1036
        %v1038 = vpop.xlane.xlu0 %1037
        %v1039 = vpack.c.bf16 %v1030, %v1030
        %v1040 = vpack.c.bf16 %v1032, %v1032
        %v1042 = vsel %vm817, %v1039, 0
        %v1045 = vsel %vm841, %v939, 0
        %1047 = vmatprep.subr.bf16.mxu0 0
        %1048 = vmatpush1.bf16.msra.mxu0 %v1045
        %1049 = vmatprep.subr.bf16.mxu0 0
        %1050 = vmatpush1.bf16.msra.mxu0 0
        %1051 = vmatprep.subr.bf16.mxu0 0
        %1052 = vmatpush1.bf16.msra.mxu0 0
        %1053 = vmatprep.subr.bf16.mxu0 0
        %1054 = vmatpush1.bf16.msra.mxu0 0
        %1055 = vmatprep.subr.bf16.mxu0 0
        %1056 = vmatpush1.bf16.msra.mxu0 0
        %1057 = vmatprep.subr.bf16.mxu0 0
        %1058 = vmatpush1.bf16.msra.mxu0 0
        %1059 = vmatprep.subr.bf16.mxu0 0
        %1060 = vmatpush1.bf16.msra.mxu0 0
        %1061 = vmatprep.subr.bf16.mxu0 0
        %1062 = vmatpush1.bf16.msra.mxu0 0
        %1063 = vmatprep.subr.bf16.mxu0 0
        %1064 = vmatpush1.bf16.msra.mxu0 0
        %1065 = vmatprep.subr.bf16.mxu0 0
        %1066 = vmatpush1.bf16.msra.mxu0 0
        %1067 = vmatprep.subr.bf16.mxu0 0
        %1068 = vmatpush1.bf16.msra.mxu0 0
        %1069 = vmatprep.subr.bf16.mxu0 0
        %1070 = vmatpush1.bf16.msra.mxu0 0
        %1071 = vmatprep.subr.bf16.mxu0 0
        %1072 = vmatpush1.bf16.msra.mxu0 0
        %1073 = vmatprep.subr.bf16.mxu0 0
        %1074 = vmatpush1.bf16.msra.mxu0 0
        %1075 = vmatprep.subr.bf16.mxu0 0
        %1076 = vmatpush1.bf16.msra.mxu0 0
        %1077 = vmatprep.subr.bf16.mxu0 0
        %1078 = vmatpush1.bf16.msra.mxu0 0
        %1079 = vmatprep.mubr.bf16.mxu0 0
        %1080 = vmatmul.mubr.bf16.gmra.mrb[0].mxu0 %v1042
        %v1081 = vpop.f32.mrb[0].mxu0
        %v1082 = vadd.f32 0.0, %v1081
        %v1083 = vpop.f32.mrb[0].mxu0
        %v1084 = vpop.f32.mrb[0].mxu0
        %v1085 = vpop.f32.mrb[0].mxu0
        %1086 = vdwg.mxu0
        %v1088 = vsel %vm817, %v1040, 0
        %v1091 = vsel %vm841, %v940, 0
        %1093 = vmatprep.subr.bf16.mxu0 0
        %1094 = vmatpush1.bf16.msra.mxu0 %v1091
        %1095 = vmatprep.subr.bf16.mxu0 0
        %1096 = vmatpush1.bf16.msra.mxu0 0
        %1097 = vmatprep.subr.bf16.mxu0 0
        %1098 = vmatpush1.bf16.msra.mxu0 0
        %1099 = vmatprep.subr.bf16.mxu0 0
        %1100 = vmatpush1.bf16.msra.mxu0 0
        %1101 = vmatprep.subr.bf16.mxu0 0
        %1102 = vmatpush1.bf16.msra.mxu0 0
        %1103 = vmatprep.subr.bf16.mxu0 0
        %1104 = vmatpush1.bf16.msra.mxu0 0
        %1105 = vmatprep.subr.bf16.mxu0 0
        %1106 = vmatpush1.bf16.msra.mxu0 0
        %1107 = vmatprep.subr.bf16.mxu0 0
        %1108 = vmatpush1.bf16.msra.mxu0 0
        %1109 = vmatprep.subr.bf16.mxu0 0
        %1110 = vmatpush1.bf16.msra.mxu0 0
        %1111 = vmatprep.subr.bf16.mxu0 0
        %1112 = vmatpush1.bf16.msra.mxu0 0
        %1113 = vmatprep.subr.bf16.mxu0 0
        %1114 = vmatpush1.bf16.msra.mxu0 0
        %1115 = vmatprep.subr.bf16.mxu0 0
        %1116 = vmatpush1.bf16.msra.mxu0 0
        %1117 = vmatprep.subr.bf16.mxu0 0
        %1118 = vmatpush1.bf16.msra.mxu0 0
        %1119 = vmatprep.subr.bf16.mxu0 0
        %1120 = vmatpush1.bf16.msra.mxu0 0
        %1121 = vmatprep.subr.bf16.mxu0 0
        %1122 = vmatpush1.bf16.msra.mxu0 0
        %1123 = vmatprep.subr.bf16.mxu0 0
        %1124 = vmatpush1.bf16.msra.mxu0 0
        %1125 = vmatprep.mubr.bf16.mxu0 0
        %1126 = vmatmul.mubr.bf16.gmra.mrb[0].mxu0 %v1088
        %v1127 = vpop.f32.mrb[0].mxu0
        %v1128 = vadd.f32 0.0, %v1127
        %v1129 = vpop.f32.mrb[0].mxu0
        %v1130 = vpop.f32.mrb[0].mxu0
        %v1131 = vpop.f32.mrb[0].mxu0
        %1132 = vdwg.mxu0
        %v1133 = vrcp.pop %v1035
        %v1134 = vrcp.pop %v1038
        %v1135 = vmul.f32 %v1082, %v1133
        %v1136 = vmul.f32 %v1128, %v1134
        %v1137 = vpack.c.bf16 %v550, %v550
        %v1138 = vpack.c.bf16 %v554, %v554
        %v1139 = vpack.c.bf16 %v636, %v636
        %v1140 = vpack.c.bf16 %v640, %v640
        %v1141 = vpack.c.bf16 %v722, %v722
        %v1142 = vpack.c.bf16 %v726, %v726
        %1143 = vmatprep.subr.bf16.mxu0 0
        %1144 = vmatpush1.bf16.xpose.msra.mxu0 %v1139
        %1145 = vmatprep.subr.bf16.mxu0 0
        %1146 = vmatpush1.bf16.xpose.msra.mxu0 0
        %1147 = vmatprep.subr.bf16.mxu0 0
        %1148 = vmatpush1.bf16.xpose.msra.mxu0 0
        %1149 = vmatprep.subr.bf16.mxu0 0
        %1150 = vmatpush1.bf16.xpose.msra.mxu0 0
        %1151 = vmatprep.subr.bf16.mxu0 0
        %1152 = vmatpush1.bf16.xpose.msra.mxu0 0
        %1153 = vmatprep.subr.bf16.mxu0 0
        %1154 = vmatpush1.bf16.xpose.msra.mxu0 0
        %1155 = vmatprep.subr.bf16.mxu0 0
        %1156 = vmatpush1.bf16.xpose.msra.mxu0 0
        %1157 = vmatprep.subr.bf16.mxu0 0
        %1158 = vmatpush1.bf16.xpose.msra.mxu0 0
        %1159 = vmatprep.subr.bf16.mxu0 0
        %1160 = vmatpush1.bf16.xpose.msra.mxu0 0
        %1161 = vmatprep.subr.bf16.mxu0 0
        %1162 = vmatpush1.bf16.xpose.msra.mxu0 0
        %1163 = vmatprep.subr.bf16.mxu0 0
        %1164 = vmatpush1.bf16.xpose.msra.mxu0 0
        %1165 = vmatprep.subr.bf16.mxu0 0
        %1166 = vmatpush1.bf16.xpose.msra.mxu0 0
        %1167 = vmatprep.subr.bf16.mxu0 0
        %1168 = vmatpush1.bf16.xpose.msra.mxu0 0
        %1169 = vmatprep.subr.bf16.mxu0 0
        %1170 = vmatpush1.bf16.xpose.msra.mxu0 0
        %1171 = vmatprep.subr.bf16.mxu0 0
        %1172 = vmatpush1.bf16.xpose.msra.mxu0 0
        %1173 = vmatprep.subr.bf16.mxu0 0
        %1174 = vmatpush1.bf16.xpose.msra.mxu0 0
        %1175 = vmatprep.mubr.bf16.mxu0 0
        %1176 = vmatmul.mubr.bf16.gmra.mrb[0].mxu0 %v1137
        %v1177 = vpop.f32.mrb[0].mxu0
        %v1178 = vadd.f32 %v730, %v1177
        %v1179 = vpop.f32.mrb[0].mxu0
        %v1180 = vpop.f32.mrb[0].mxu0
        %v1181 = vpop.f32.mrb[0].mxu0
        %1182 = vdwg.mxu0
        %1183 = vmatprep.subr.bf16.mxu0 0
        %1184 = vmatpush1.bf16.xpose.msra.mxu0 %v1140
        %1185 = vmatprep.subr.bf16.mxu0 0
        %1186 = vmatpush1.bf16.xpose.msra.mxu0 0
        %1187 = vmatprep.subr.bf16.mxu0 0
        %1188 = vmatpush1.bf16.xpose.msra.mxu0 0
        %1189 = vmatprep.subr.bf16.mxu0 0
        %1190 = vmatpush1.bf16.xpose.msra.mxu0 0
        %1191 = vmatprep.subr.bf16.mxu0 0
        %1192 = vmatpush1.bf16.xpose.msra.mxu0 0
        %1193 = vmatprep.subr.bf16.mxu0 0
        %1194 = vmatpush1.bf16.xpose.msra.mxu0 0
        %1195 = vmatprep.subr.bf16.mxu0 0
        %1196 = vmatpush1.bf16.xpose.msra.mxu0 0
        %1197 = vmatprep.subr.bf16.mxu0 0
        %1198 = vmatpush1.bf16.xpose.msra.mxu0 0
        %1199 = vmatprep.subr.bf16.mxu0 0
        %1200 = vmatpush1.bf16.xpose.msra.mxu0 0
        %1201 = vmatprep.subr.bf16.mxu0 0
        %1202 = vmatpush1.bf16.xpose.msra.mxu0 0
        %1203 = vmatprep.subr.bf16.mxu0 0
        %1204 = vmatpush1.bf16.xpose.msra.mxu0 0
        %1205 = vmatprep.subr.bf16.mxu0 0
        %1206 = vmatpush1.bf16.xpose.msra.mxu0 0
        %1207 = vmatprep.subr.bf16.mxu0 0
        %1208 = vmatpush1.bf16.xpose.msra.mxu0 0
        %1209 = vmatprep.subr.bf16.mxu0 0
        %1210 = vmatpush1.bf16.xpose.msra.mxu0 0
        %1211 = vmatprep.subr.bf16.mxu0 0
        %1212 = vmatpush1.bf16.xpose.msra.mxu0 0
        %1213 = vmatprep.subr.bf16.mxu0 0
        %1214 = vmatpush1.bf16.xpose.msra.mxu0 0
        %1215 = vmatprep.mubr.bf16.mxu0 0
        %1216 = vmatmul.mubr.bf16.gmra.mrb[0].mxu0 %v1138
        %v1217 = vpop.f32.mrb[0].mxu0
        %v1218 = vadd.f32 %v730, %v1217
        %v1219 = vpop.f32.mrb[0].mxu0
        %v1220 = vpop.f32.mrb[0].mxu0
        %v1221 = vpop.f32.mrb[0].mxu0
        %1222 = vdwg.mxu0
        %v1223 = vsel %vm817, %v1178, -inf
        %1224 = vmax.xlane.f32.xlu0 %v1223
        %v1225 = vpop.xlane.xlu0 %1224
        %v1226 = vsel %vm817, %v1218, -inf
        %1227 = vmax.xlane.f32.xlu0 %v1226
        %v1228 = vpop.xlane.xlu0 %1227
        %v1229 = vsub.f32 %v1178, %v1225
        %v1230 = vsub.f32 %v1218, %v1228
        %v1231 = vmul.f32 %v1229, 1.442695
        %v1232 = vpow.pop %v1231
        %v1233 = vmul.f32 %v1230, 1.442695
        %v1234 = vpow.pop %v1233
        %v1235 = vsel %vm817, %v1232, 0.0
        %1236 = vadd.xlane.f32.xlu0 %v1235
        %v1237 = vpop.xlane.xlu0 %1236
        %v1238 = vsel %vm817, %v1234, 0.0
        %1239 = vadd.xlane.f32.xlu0 %v1238
        %v1240 = vpop.xlane.xlu0 %1239
        %v1241 = vpack.c.bf16 %v1232, %v1232
        %v1242 = vpack.c.bf16 %v1234, %v1234
        %v1244 = vsel %vm817, %v1241, 0
        %v1247 = vsel %vm841, %v1141, 0
        %1249 = vmatprep.subr.bf16.mxu0 0
        %1250 = vmatpush1.bf16.msra.mxu0 %v1247
        %1251 = vmatprep.subr.bf16.mxu0 0
        %1252 = vmatpush1.bf16.msra.mxu0 0
        %1253 = vmatprep.subr.bf16.mxu0 0
        %1254 = vmatpush1.bf16.msra.mxu0 0
        %1255 = vmatprep.subr.bf16.mxu0 0
        %1256 = vmatpush1.bf16.msra.mxu0 0
        %1257 = vmatprep.subr.bf16.mxu0 0
        %1258 = vmatpush1.bf16.msra.mxu0 0
        %1259 = vmatprep.subr.bf16.mxu0 0
        %1260 = vmatpush1.bf16.msra.mxu0 0
        %1261 = vmatprep.subr.bf16.mxu0 0
        %1262 = vmatpush1.bf16.msra.mxu0 0
        %1263 = vmatprep.subr.bf16.mxu0 0
        %1264 = vmatpush1.bf16.msra.mxu0 0
        %1265 = vmatprep.subr.bf16.mxu0 0
        %1266 = vmatpush1.bf16.msra.mxu0 0
        %1267 = vmatprep.subr.bf16.mxu0 0
        %1268 = vmatpush1.bf16.msra.mxu0 0
        %1269 = vmatprep.subr.bf16.mxu0 0
        %1270 = vmatpush1.bf16.msra.mxu0 0
        %1271 = vmatprep.subr.bf16.mxu0 0
        %1272 = vmatpush1.bf16.msra.mxu0 0
        %1273 = vmatprep.subr.bf16.mxu0 0
        %1274 = vmatpush1.bf16.msra.mxu0 0
        %1275 = vmatprep.subr.bf16.mxu0 0
        %1276 = vmatpush1.bf16.msra.mxu0 0
        %1277 = vmatprep.subr.bf16.mxu0 0
        %1278 = vmatpush1.bf16.msra.mxu0 0
        %1279 = vmatprep.subr.bf16.mxu0 0
        %1280 = vmatpush1.bf16.msra.mxu0 0
        %1281 = vmatprep.mubr.bf16.mxu0 0
        %1282 = vmatmul.mubr.bf16.gmra.mrb[0].mxu0 %v1244
        %v1283 = vpop.f32.mrb[0].mxu0
        %v1284 = vadd.f32 0.0, %v1283
        %v1285 = vpop.f32.mrb[0].mxu0
        %v1286 = vpop.f32.mrb[0].mxu0
        %v1287 = vpop.f32.mrb[0].mxu0
        %1288 = vdwg.mxu0
        %v1290 = vsel %vm817, %v1242, 0
        %v1293 = vsel %vm841, %v1142, 0
        %1295 = vmatprep.subr.bf16.mxu0 0
        %1296 = vmatpush1.bf16.msra.mxu0 %v1293
        %1297 = vmatprep.subr.bf16.mxu0 0
        %1298 = vmatpush1.bf16.msra.mxu0 0
        %1299 = vmatprep.subr.bf16.mxu0 0
        %1300 = vmatpush1.bf16.msra.mxu0 0
        %1301 = vmatprep.subr.bf16.mxu0 0
        %1302 = vmatpush1.bf16.msra.mxu0 0
        %1303 = vmatprep.subr.bf16.mxu0 0
        %1304 = vmatpush1.bf16.msra.mxu0 0
        %1305 = vmatprep.subr.bf16.mxu0 0
        %1306 = vmatpush1.bf16.msra.mxu0 0
        %1307 = vmatprep.subr.bf16.mxu0 0
        %1308 = vmatpush1.bf16.msra.mxu0 0
        %1309 = vmatprep.subr.bf16.mxu0 0
        %1310 = vmatpush1.bf16.msra.mxu0 0
        %1311 = vmatprep.subr.bf16.mxu0 0
        %1312 = vmatpush1.bf16.msra.mxu0 0
        %1313 = vmatprep.subr.bf16.mxu0 0
        %1314 = vmatpush1.bf16.msra.mxu0 0
        %1315 = vmatprep.subr.bf16.mxu0 0
        %1316 = vmatpush1.bf16.msra.mxu0 0
        %1317 = vmatprep.subr.bf16.mxu0 0
        %1318 = vmatpush1.bf16.msra.mxu0 0
        %1319 = vmatprep.subr.bf16.mxu0 0
        %1320 = vmatpush1.bf16.msra.mxu0 0
        %1321 = vmatprep.subr.bf16.mxu0 0
        %1322 = vmatpush1.bf16.msra.mxu0 0
        %1323 = vmatprep.subr.bf16.mxu0 0
        %1324 = vmatpush1.bf16.msra.mxu0 0
        %1325 = vmatprep.subr.bf16.mxu0 0
        %1326 = vmatpush1.bf16.msra.mxu0 0
        %1327 = vmatprep.mubr.bf16.mxu0 0
        %1328 = vmatmul.mubr.bf16.gmra.mrb[0].mxu0 %v1290
        %v1329 = vpop.f32.mrb[0].mxu0
        %v1330 = vadd.f32 0.0, %v1329
        %v1331 = vpop.f32.mrb[0].mxu0
        %v1332 = vpop.f32.mrb[0].mxu0
        %v1333 = vpop.f32.mrb[0].mxu0
        %1334 = vdwg.mxu0
        %v1335 = vrcp.pop %v1237
        %v1336 = vrcp.pop %v1240
        %v1337 = vmul.f32 %v1284, %v1335
        %v1338 = vmul.f32 %v1330, %v1336
        %v1339 = vpack.c.bf16 %v552, %v552
        %v1340 = vpack.c.bf16 %v556, %v556
        %v1341 = vpack.c.bf16 %v638, %v638
        %v1342 = vpack.c.bf16 %v642, %v642
        %v1343 = vpack.c.bf16 %v724, %v724
        %v1344 = vpack.c.bf16 %v728, %v728
        %1345 = vmatprep.subr.bf16.mxu0 0
        %1346 = vmatpush1.bf16.xpose.msra.mxu0 %v1341
        %1347 = vmatprep.subr.bf16.mxu0 0
        %1348 = vmatpush1.bf16.xpose.msra.mxu0 0
        %1349 = vmatprep.subr.bf16.mxu0 0
        %1350 = vmatpush1.bf16.xpose.msra.mxu0 0
        %1351 = vmatprep.subr.bf16.mxu0 0
        %1352 = vmatpush1.bf16.xpose.msra.mxu0 0
        %1353 = vmatprep.subr.bf16.mxu0 0
        %1354 = vmatpush1.bf16.xpose.msra.mxu0 0
        %1355 = vmatprep.subr.bf16.mxu0 0
        %1356 = vmatpush1.bf16.xpose.msra.mxu0 0
        %1357 = vmatprep.subr.bf16.mxu0 0
        %1358 = vmatpush1.bf16.xpose.msra.mxu0 0
        %1359 = vmatprep.subr.bf16.mxu0 0
        %1360 = vmatpush1.bf16.xpose.msra.mxu0 0
        %1361 = vmatprep.subr.bf16.mxu0 0
        %1362 = vmatpush1.bf16.xpose.msra.mxu0 0
        %1363 = vmatprep.subr.bf16.mxu0 0
        %1364 = vmatpush1.bf16.xpose.msra.mxu0 0
        %1365 = vmatprep.subr.bf16.mxu0 0
        %1366 = vmatpush1.bf16.xpose.msra.mxu0 0
        %1367 = vmatprep.subr.bf16.mxu0 0
        %1368 = vmatpush1.bf16.xpose.msra.mxu0 0
        %1369 = vmatprep.subr.bf16.mxu0 0
        %1370 = vmatpush1.bf16.xpose.msra.mxu0 0
        %1371 = vmatprep.subr.bf16.mxu0 0
        %1372 = vmatpush1.bf16.xpose.msra.mxu0 0
        %1373 = vmatprep.subr.bf16.mxu0 0
        %1374 = vmatpush1.bf16.xpose.msra.mxu0 0
        %1375 = vmatprep.subr.bf16.mxu0 0
        %1376 = vmatpush1.bf16.xpose.msra.mxu0 0
        %1377 = vmatprep.mubr.bf16.mxu0 0
        %1378 = vmatmul.mubr.bf16.gmra.mrb[0].mxu0 %v1339
        %v1379 = vpop.f32.mrb[0].mxu0
        %v1380 = vadd.f32 %v730, %v1379
        %v1381 = vpop.f32.mrb[0].mxu0
        %v1382 = vpop.f32.mrb[0].mxu0
        %v1383 = vpop.f32.mrb[0].mxu0
        %1384 = vdwg.mxu0
        %1385 = vmatprep.subr.bf16.mxu0 0
        %1386 = vmatpush1.bf16.xpose.msra.mxu0 %v1342
        %1387 = vmatprep.subr.bf16.mxu0 0
        %1388 = vmatpush1.bf16.xpose.msra.mxu0 0
        %1389 = vmatprep.subr.bf16.mxu0 0
        %1390 = vmatpush1.bf16.xpose.msra.mxu0 0
        %1391 = vmatprep.subr.bf16.mxu0 0
        %1392 = vmatpush1.bf16.xpose.msra.mxu0 0
        %1393 = vmatprep.subr.bf16.mxu0 0
        %1394 = vmatpush1.bf16.xpose.msra.mxu0 0
        %1395 = vmatprep.subr.bf16.mxu0 0
        %1396 = vmatpush1.bf16.xpose.msra.mxu0 0
        %1397 = vmatprep.subr.bf16.mxu0 0
        %1398 = vmatpush1.bf16.xpose.msra.mxu0 0
        %1399 = vmatprep.subr.bf16.mxu0 0
        %1400 = vmatpush1.bf16.xpose.msra.mxu0 0
        %1401 = vmatprep.subr.bf16.mxu0 0
        %1402 = vmatpush1.bf16.xpose.msra.mxu0 0
        %1403 = vmatprep.subr.bf16.mxu0 0
        %1404 = vmatpush1.bf16.xpose.msra.mxu0 0
        %1405 = vmatprep.subr.bf16.mxu0 0
        %1406 = vmatpush1.bf16.xpose.msra.mxu0 0
        %1407 = vmatprep.subr.bf16.mxu0 0
        %1408 = vmatpush1.bf16.xpose.msra.mxu0 0
        %1409 = vmatprep.subr.bf16.mxu0 0
        %1410 = vmatpush1.bf16.xpose.msra.mxu0 0
        %1411 = vmatprep.subr.bf16.mxu0 0
        %1412 = vmatpush1.bf16.xpose.msra.mxu0 0
        %1413 = vmatprep.subr.bf16.mxu0 0
        %1414 = vmatpush1.bf16.xpose.msra.mxu0 0
        %1415 = vmatprep.subr.bf16.mxu0 0
        %1416 = vmatpush1.bf16.xpose.msra.mxu0 0
        %1417 = vmatprep.mubr.bf16.mxu0 0
        %1418 = vmatmul.mubr.bf16.gmra.mrb[0].mxu0 %v1340
        %v1419 = vpop.f32.mrb[0].mxu0
        %v1420 = vadd.f32 %v730, %v1419
        %v1421 = vpop.f32.mrb[0].mxu0
        %v1422 = vpop.f32.mrb[0].mxu0
        %v1423 = vpop.f32.mrb[0].mxu0
        %1424 = vdwg.mxu0
        %v1425 = vsel %vm817, %v1380, -inf
        %1426 = vmax.xlane.f32.xlu0 %v1425
        %v1427 = vpop.xlane.xlu0 %1426
        %v1428 = vsel %vm817, %v1420, -inf
        %1429 = vmax.xlane.f32.xlu0 %v1428
        %v1430 = vpop.xlane.xlu0 %1429
        %v1431 = vsub.f32 %v1380, %v1427
        %v1432 = vsub.f32 %v1420, %v1430
        %v1433 = vmul.f32 %v1431, 1.442695
        %v1434 = vpow.pop %v1433
        %v1435 = vmul.f32 %v1432, 1.442695
        %v1436 = vpow.pop %v1435
        %v1437 = vsel %vm817, %v1434, 0.0
        %1438 = vadd.xlane.f32.xlu0 %v1437
        %v1439 = vpop.xlane.xlu0 %1438
        %v1440 = vsel %vm817, %v1436, 0.0
        %1441 = vadd.xlane.f32.xlu0 %v1440
        %v1442 = vpop.xlane.xlu0 %1441
        %v1443 = vpack.c.bf16 %v1434, %v1434
        %v1444 = vpack.c.bf16 %v1436, %v1436
        %v1446 = vsel %vm817, %v1443, 0
        %v1449 = vsel %vm841, %v1343, 0
        %1451 = vmatprep.subr.bf16.mxu0 0
        %1452 = vmatpush1.bf16.msra.mxu0 %v1449
        %1453 = vmatprep.subr.bf16.mxu0 0
        %1454 = vmatpush1.bf16.msra.mxu0 0
        %1455 = vmatprep.subr.bf16.mxu0 0
        %1456 = vmatpush1.bf16.msra.mxu0 0
        %1457 = vmatprep.subr.bf16.mxu0 0
        %1458 = vmatpush1.bf16.msra.mxu0 0
        %1459 = vmatprep.subr.bf16.mxu0 0
        %1460 = vmatpush1.bf16.msra.mxu0 0
        %1461 = vmatprep.subr.bf16.mxu0 0
        %1462 = vmatpush1.bf16.msra.mxu0 0
        %1463 = vmatprep.subr.bf16.mxu0 0
        %1464 = vmatpush1.bf16.msra.mxu0 0
        %1465 = vmatprep.subr.bf16.mxu0 0
        %1466 = vmatpush1.bf16.msra.mxu0 0
        %1467 = vmatprep.subr.bf16.mxu0 0
        %1468 = vmatpush1.bf16.msra.mxu0 0
        %1469 = vmatprep.subr.bf16.mxu0 0
        %1470 = vmatpush1.bf16.msra.mxu0 0
        %1471 = vmatprep.subr.bf16.mxu0 0
        %1472 = vmatpush1.bf16.msra.mxu0 0
        %1473 = vmatprep.subr.bf16.mxu0 0
        %1474 = vmatpush1.bf16.msra.mxu0 0
        %1475 = vmatprep.subr.bf16.mxu0 0
        %1476 = vmatpush1.bf16.msra.mxu0 0
        %1477 = vmatprep.subr.bf16.mxu0 0
        %1478 = vmatpush1.bf16.msra.mxu0 0
        %1479 = vmatprep.subr.bf16.mxu0 0
        %1480 = vmatpush1.bf16.msra.mxu0 0
        %1481 = vmatprep.subr.bf16.mxu0 0
        %1482 = vmatpush1.bf16.msra.mxu0 0
        %1483 = vmatprep.mubr.bf16.mxu0 0
        %1484 = vmatmul.mubr.bf16.gmra.mrb[0].mxu0 %v1446
        %v1485 = vpop.f32.mrb[0].mxu0
        %v1486 = vadd.f32 0.0, %v1485
        %v1487 = vpop.f32.mrb[0].mxu0
        %v1488 = vpop.f32.mrb[0].mxu0
        %v1489 = vpop.f32.mrb[0].mxu0
        %1490 = vdwg.mxu0
        %v1492 = vsel %vm817, %v1444, 0
        %v1495 = vsel %vm841, %v1344, 0
        %1497 = vmatprep.subr.bf16.mxu0 0
        %1498 = vmatpush1.bf16.msra.mxu0 %v1495
        %1499 = vmatprep.subr.bf16.mxu0 0
        %1500 = vmatpush1.bf16.msra.mxu0 0
        %1501 = vmatprep.subr.bf16.mxu0 0
        %1502 = vmatpush1.bf16.msra.mxu0 0
        %1503 = vmatprep.subr.bf16.mxu0 0
        %1504 = vmatpush1.bf16.msra.mxu0 0
        %1505 = vmatprep.subr.bf16.mxu0 0
        %1506 = vmatpush1.bf16.msra.mxu0 0
        %1507 = vmatprep.subr.bf16.mxu0 0
        %1508 = vmatpush1.bf16.msra.mxu0 0
        %1509 = vmatprep.subr.bf16.mxu0 0
        %1510 = vmatpush1.bf16.msra.mxu0 0
        %1511 = vmatprep.subr.bf16.mxu0 0
        %1512 = vmatpush1.bf16.msra.mxu0 0
        %1513 = vmatprep.subr.bf16.mxu0 0
        %1514 = vmatpush1.bf16.msra.mxu0 0
        %1515 = vmatprep.subr.bf16.mxu0 0
        %1516 = vmatpush1.bf16.msra.mxu0 0
        %1517 = vmatprep.subr.bf16.mxu0 0
        %1518 = vmatpush1.bf16.msra.mxu0 0
        %1519 = vmatprep.subr.bf16.mxu0 0
        %1520 = vmatpush1.bf16.msra.mxu0 0
        %1521 = vmatprep.subr.bf16.mxu0 0
        %1522 = vmatpush1.bf16.msra.mxu0 0
        %1523 = vmatprep.subr.bf16.mxu0 0
        %1524 = vmatpush1.bf16.msra.mxu0 0
        %1525 = vmatprep.subr.bf16.mxu0 0
        %1526 = vmatpush1.bf16.msra.mxu0 0
        %1527 = vmatprep.subr.bf16.mxu0 0
        %1528 = vmatpush1.bf16.msra.mxu0 0
        %1529 = vmatprep.mubr.bf16.mxu0 0
        %1530 = vmatmul.mubr.bf16.gmra.mrb[0].mxu0 %v1492
        %v1531 = vpop.f32.mrb[0].mxu0
        %v1532 = vadd.f32 0.0, %v1531
        %v1533 = vpop.f32.mrb[0].mxu0
        %v1534 = vpop.f32.mrb[0].mxu0
        %v1535 = vpop.f32.mrb[0].mxu0
        %1536 = vdwg.mxu0
        %v1537 = vrcp.pop %v1439
        %v1538 = vrcp.pop %v1442
        %v1539 = vmul.f32 %v1486, %v1537
        %v1540 = vmul.f32 %v1532, %v1538
        %v1541 = vpack.c.bf16 %v934, %v933
        %v1542 = vpack.c.bf16 %v1136, %v1135
        %v1543 = vpack.c.bf16 %v1338, %v1337
        %v1544 = vpack.c.bf16 %v1540, %v1539
        %v1545 = vld [vmem:[%s3] sm:$0xf]
        %v1546 = vld [vmem:[%s3 + $0x4] sm:$0xf]
        %v1547 = vld [vmem:[%s3 + $0x8] sm:$0xf]
        %v1548 = vld [vmem:[%s3 + $0xc] sm:$0xf]
        %v1549 = vld [vmem:[%s3 + $0x10] sm:$0xf]
        %v1550 = vld [vmem:[%s3 + $0x14] sm:$0xf]
        %v1551 = vld [vmem:[%s3 + $0x18] sm:$0xf]
        %v1552 = vld [vmem:[%s3 + $0x1c] sm:$0xf]
        %v1553 = vld [vmem:[%s3 + $0x20] sm:$0xf]
        %v1554 = vld [vmem:[%s3 + $0x24] sm:$0xf]
        %v1555 = vld [vmem:[%s3 + $0x28] sm:$0xf]
        %v1556 = vld [vmem:[%s3 + $0x2c] sm:$0xf]
        %v1557 = vld [vmem:[%s3 + $0x30] sm:$0xf]
        %v1558 = vld [vmem:[%s3 + $0x34] sm:$0xf]
        %v1559 = vld [vmem:[%s3 + $0x38] sm:$0xf]
        %v1560 = vld [vmem:[%s3 + $0x3c] sm:$0xf]
        %v1561 = vld [vmem:[%s3 + $0x40] sm:$0xf]
        %v1562 = vld [vmem:[%s3 + $0x44] sm:$0xf]
        %v1563 = vld [vmem:[%s3 + $0x48] sm:$0xf]
        %v1564 = vld [vmem:[%s3 + $0x4c] sm:$0xf]
        %v1565 = vld [vmem:[%s3 + $0x50] sm:$0xf]
        %v1566 = vld [vmem:[%s3 + $0x54] sm:$0xf]
        %v1567 = vld [vmem:[%s3 + $0x58] sm:$0xf]
        %v1568 = vld [vmem:[%s3 + $0x5c] sm:$0xf]
        %v1569 = vld [vmem:[%s3 + $0x60] sm:$0xf]
        %v1570 = vld [vmem:[%s3 + $0x64] sm:$0xf]
        %v1571 = vld [vmem:[%s3 + $0x68] sm:$0xf]
        %v1572 = vld [vmem:[%s3 + $0x6c] sm:$0xf]
        %v1573 = vld [vmem:[%s3 + $0x70] sm:$0xf]
        %v1574 = vld [vmem:[%s3 + $0x74] sm:$0xf]
        %v1575 = vld [vmem:[%s3 + $0x78] sm:$0xf]
        %v1576 = vld [vmem:[%s3 + $0x7c] sm:$0xf]
        %v1577 = vld [vmem:[%s3 + $0x80] sm:$0xf]
        %v1578 = vld [vmem:[%s3 + $0x84] sm:$0xf]
        %v1579 = vld [vmem:[%s3 + $0x88] sm:$0xf]
        %v1580 = vld [vmem:[%s3 + $0x8c] sm:$0xf]
        %v1581 = vld [vmem:[%s3 + $0x90] sm:$0xf]
        %v1582 = vld [vmem:[%s3 + $0x94] sm:$0xf]
        %v1583 = vld [vmem:[%s3 + $0x98] sm:$0xf]
        %v1584 = vld [vmem:[%s3 + $0x9c] sm:$0xf]
        %v1585 = vld [vmem:[%s3 + $0xa0] sm:$0xf]
        %v1586 = vld [vmem:[%s3 + $0xa4] sm:$0xf]
        %v1587 = vld [vmem:[%s3 + $0xa8] sm:$0xf]
        %v1588 = vld [vmem:[%s3 + $0xac] sm:$0xf]
        %v1589 = vld [vmem:[%s3 + $0xb0] sm:$0xf]
        %v1590 = vld [vmem:[%s3 + $0xb4] sm:$0xf]
        %v1591 = vld [vmem:[%s3 + $0xb8] sm:$0xf]
        %v1592 = vld [vmem:[%s3 + $0xbc] sm:$0xf]
        %v1593 = vld [vmem:[%s3 + $0xc0] sm:$0xf]
        %v1594 = vld [vmem:[%s3 + $0xc4] sm:$0xf]
        %v1595 = vld [vmem:[%s3 + $0xc8] sm:$0xf]
        %v1596 = vld [vmem:[%s3 + $0xcc] sm:$0xf]
        %v1597 = vld [vmem:[%s3 + $0xd0] sm:$0xf]
        %v1598 = vld [vmem:[%s3 + $0xd4] sm:$0xf]
        %v1599 = vld [vmem:[%s3 + $0xd8] sm:$0xf]
        %v1600 = vld [vmem:[%s3 + $0xdc] sm:$0xf]
        %v1601 = vld [vmem:[%s3 + $0xe0] sm:$0xf]
        %v1602 = vld [vmem:[%s3 + $0xe4] sm:$0xf]
        %v1603 = vld [vmem:[%s3 + $0xe8] sm:$0xf]
        %v1604 = vld [vmem:[%s3 + $0xec] sm:$0xf]
        %v1605 = vld [vmem:[%s3 + $0xf0] sm:$0xf]
        %v1606 = vld [vmem:[%s3 + $0xf4] sm:$0xf]
        %v1607 = vld [vmem:[%s3 + $0xf8] sm:$0xf]
        %v1608 = vld [vmem:[%s3 + $0xfc] sm:$0xf]
        %v1609 = vlaneseq
        %v1610 = vshrl.u32 %v1609, 7
        %v1611 = vsub.s32 4, %v1610
        %v1612 = vrot.slane %v283, %v1611
        %v1677 = vunpack.c.l.b16 %v1545
        %v1678 = vunpack.c.l.b16 %v1546
        %v1679 = vunpack.c.l.b16 %v1547
        %v1680 = vunpack.c.l.b16 %v1548
        %v1681 = vunpack.c.l.b16 %v1549
        %v1682 = vunpack.c.l.b16 %v1550
        %v1683 = vunpack.c.l.b16 %v1551
        %v1684 = vunpack.c.l.b16 %v1552
        %v1685 = vunpack.c.l.b16 %v1553
        %v1686 = vunpack.c.l.b16 %v1554
        %v1687 = vunpack.c.l.b16 %v1555
        %v1688 = vunpack.c.l.b16 %v1556
        %v1689 = vunpack.c.l.b16 %v1557
        %v1690 = vunpack.c.l.b16 %v1558
        %v1691 = vunpack.c.l.b16 %v1559
        %v1692 = vunpack.c.l.b16 %v1560
        %v1693 = vunpack.c.l.b16 %v1561
        %v1694 = vunpack.c.l.b16 %v1562
        %v1695 = vunpack.c.l.b16 %v1563
        %v1696 = vunpack.c.l.b16 %v1564
        %v1697 = vunpack.c.l.b16 %v1565
        %v1698 = vunpack.c.l.b16 %v1566
        %v1699 = vunpack.c.l.b16 %v1567
        %v1700 = vunpack.c.l.b16 %v1568
        %v1701 = vunpack.c.l.b16 %v1569
        %v1702 = vunpack.c.l.b16 %v1570
        %v1703 = vunpack.c.l.b16 %v1571
        %v1704 = vunpack.c.l.b16 %v1572
        %v1705 = vunpack.c.l.b16 %v1573
        %v1706 = vunpack.c.l.b16 %v1574
        %v1707 = vunpack.c.l.b16 %v1575
        %v1708 = vunpack.c.l.b16 %v1576
        %v1709 = vunpack.c.l.b16 %v1577
        %v1710 = vunpack.c.l.b16 %v1578
        %v1711 = vunpack.c.l.b16 %v1579
        %v1712 = vunpack.c.l.b16 %v1580
        %v1713 = vunpack.c.l.b16 %v1581
        %v1714 = vunpack.c.l.b16 %v1582
        %v1715 = vunpack.c.l.b16 %v1583
        %v1716 = vunpack.c.l.b16 %v1584
        %v1717 = vunpack.c.l.b16 %v1585
        %v1718 = vunpack.c.l.b16 %v1586
        %v1719 = vunpack.c.l.b16 %v1587
        %v1720 = vunpack.c.l.b16 %v1588
        %v1721 = vunpack.c.l.b16 %v1589
        %v1722 = vunpack.c.l.b16 %v1590
        %v1723 = vunpack.c.l.b16 %v1591
        %v1724 = vunpack.c.l.b16 %v1592
        %v1725 = vunpack.c.l.b16 %v1593
        %v1726 = vunpack.c.l.b16 %v1594
        %v1727 = vunpack.c.l.b16 %v1595
        %v1728 = vunpack.c.l.b16 %v1596
        %v1729 = vunpack.c.l.b16 %v1597
        %v1730 = vunpack.c.l.b16 %v1598
        %v1731 = vunpack.c.l.b16 %v1599
        %v1732 = vunpack.c.l.b16 %v1600
        %v1733 = vunpack.c.l.b16 %v1601
        %v1734 = vunpack.c.l.b16 %v1602
        %v1735 = vunpack.c.l.b16 %v1603
        %v1736 = vunpack.c.l.b16 %v1604
        %v1737 = vunpack.c.l.b16 %v1605
        %v1738 = vunpack.c.l.b16 %v1606
        %v1739 = vunpack.c.l.b16 %v1607
        %v1740 = vunpack.c.l.b16 %v1608
        %v1741 = vpack.c.b16 %v1678, %v1677
        %v1742 = vpack.c.b16 %v1680, %v1679
        %v1743 = vpack.c.b16 %v1682, %v1681
        %v1744 = vpack.c.b16 %v1684, %v1683
        %v1745 = vpack.c.b16 %v1686, %v1685
        %v1746 = vpack.c.b16 %v1688, %v1687
        %v1747 = vpack.c.b16 %v1690, %v1689
        %v1748 = vpack.c.b16 %v1692, %v1691
        %v1749 = vpack.c.b16 %v1694, %v1693
        %v1750 = vpack.c.b16 %v1696, %v1695
        %v1751 = vpack.c.b16 %v1698, %v1697
        %v1752 = vpack.c.b16 %v1700, %v1699
        %v1753 = vpack.c.b16 %v1702, %v1701
        %v1754 = vpack.c.b16 %v1704, %v1703
        %v1755 = vpack.c.b16 %v1706, %v1705
        %v1756 = vpack.c.b16 %v1708, %v1707
        %v1757 = vpack.c.b16 %v1710, %v1709
        %v1758 = vpack.c.b16 %v1712, %v1711
        %v1759 = vpack.c.b16 %v1714, %v1713
        %v1760 = vpack.c.b16 %v1716, %v1715
        %v1761 = vpack.c.b16 %v1718, %v1717
        %v1762 = vpack.c.b16 %v1720, %v1719
        %v1763 = vpack.c.b16 %v1722, %v1721
        %v1764 = vpack.c.b16 %v1724, %v1723
        %v1765 = vpack.c.b16 %v1726, %v1725
        %v1766 = vpack.c.b16 %v1728, %v1727
        %v1767 = vpack.c.b16 %v1730, %v1729
        %v1768 = vpack.c.b16 %v1732, %v1731
        %v1769 = vpack.c.b16 %v1734, %v1733
        %v1770 = vpack.c.b16 %v1736, %v1735
        %v1771 = vpack.c.b16 %v1738, %v1737
        %v1772 = vpack.c.b16 %v1740, %v1739
        %1805 = vmatprep.subr.bf16.mxu0 0
        %1806 = vmatpush1.bf16.msra.mxu0 %v1741
        %1807 = vmatprep.subr.bf16.mxu0 0
        %1808 = vmatpush1.bf16.msra.mxu0 %v1742
        %1809 = vmatprep.subr.bf16.mxu0 0
        %1810 = vmatpush1.bf16.msra.mxu0 %v1743
        %1811 = vmatprep.subr.bf16.mxu0 0
        %1812 = vmatpush1.bf16.msra.mxu0 %v1744
        %1813 = vmatprep.subr.bf16.mxu0 0
        %1814 = vmatpush1.bf16.msra.mxu0 %v1745
        %1815 = vmatprep.subr.bf16.mxu0 0
        %1816 = vmatpush1.bf16.msra.mxu0 %v1746
        %1817 = vmatprep.subr.bf16.mxu0 0
        %1818 = vmatpush1.bf16.msra.mxu0 %v1747
        %1819 = vmatprep.subr.bf16.mxu0 0
        %1820 = vmatpush1.bf16.msra.mxu0 %v1748
        %1821 = vmatprep.subr.bf16.mxu0 0
        %1822 = vmatpush1.bf16.msra.mxu0 %v1749
        %1823 = vmatprep.subr.bf16.mxu0 0
        %1824 = vmatpush1.bf16.msra.mxu0 %v1750
        %1825 = vmatprep.subr.bf16.mxu0 0
        %1826 = vmatpush1.bf16.msra.mxu0 %v1751
        %1827 = vmatprep.subr.bf16.mxu0 0
        %1828 = vmatpush1.bf16.msra.mxu0 %v1752
        %1829 = vmatprep.subr.bf16.mxu0 0
        %1830 = vmatpush1.bf16.msra.mxu0 %v1753
        %1831 = vmatprep.subr.bf16.mxu0 0
        %1832 = vmatpush1.bf16.msra.mxu0 %v1754
        %1833 = vmatprep.subr.bf16.mxu0 0
        %1834 = vmatpush1.bf16.msra.mxu0 %v1755
        %1835 = vmatprep.subr.bf16.mxu0 0
        %1836 = vmatpush1.bf16.msra.mxu0 %v1756
        %1837 = vmatprep.mubr.bf16.mxu0 %v1542
        %1838 = vmatmul.mubr.bf16.gmra.mrb[0].mxu0 %v1541
        %v1839 = vpop.f32.mrb[0].mxu0
        %v1840 = vadd.f32 %v1612, %v1839
        %v1841 = vpop.f32.mrb[0].mxu0
        %v1842 = vpop.f32.mrb[0].mxu0
        %v1843 = vadd.f32 %v1612, %v1842
        %v1844 = vpop.f32.mrb[0].mxu0
        %1845 = vdwg.mxu0
        %1846 = vmatprep.subr.bf16.mxu0 0
        %1847 = vmatpush1.bf16.msra.mxu0 %v1757
        %1848 = vmatprep.subr.bf16.mxu0 0
        %1849 = vmatpush1.bf16.msra.mxu0 %v1758
        %1850 = vmatprep.subr.bf16.mxu0 0
        %1851 = vmatpush1.bf16.msra.mxu0 %v1759
        %1852 = vmatprep.subr.bf16.mxu0 0
        %1853 = vmatpush1.bf16.msra.mxu0 %v1760
        %1854 = vmatprep.subr.bf16.mxu0 0
        %1855 = vmatpush1.bf16.msra.mxu0 %v1761
        %1856 = vmatprep.subr.bf16.mxu0 0
        %1857 = vmatpush1.bf16.msra.mxu0 %v1762
        %1858 = vmatprep.subr.bf16.mxu0 0
        %1859 = vmatpush1.bf16.msra.mxu0 %v1763
        %1860 = vmatprep.subr.bf16.mxu0 0
        %1861 = vmatpush1.bf16.msra.mxu0 %v1764
        %1862 = vmatprep.subr.bf16.mxu0 0
        %1863 = vmatpush1.bf16.msra.mxu0 %v1765
        %1864 = vmatprep.subr.bf16.mxu0 0
        %1865 = vmatpush1.bf16.msra.mxu0 %v1766
        %1866 = vmatprep.subr.bf16.mxu0 0
        %1867 = vmatpush1.bf16.msra.mxu0 %v1767
        %1868 = vmatprep.subr.bf16.mxu0 0
        %1869 = vmatpush1.bf16.msra.mxu0 %v1768
        %1870 = vmatprep.subr.bf16.mxu0 0
        %1871 = vmatpush1.bf16.msra.mxu0 %v1769
        %1872 = vmatprep.subr.bf16.mxu0 0
        %1873 = vmatpush1.bf16.msra.mxu0 %v1770
        %1874 = vmatprep.subr.bf16.mxu0 0
        %1875 = vmatpush1.bf16.msra.mxu0 %v1771
        %1876 = vmatprep.subr.bf16.mxu0 0
        %1877 = vmatpush1.bf16.msra.mxu0 %v1772
        %1878 = vmatprep.mubr.bf16.mxu0 %v1544
        %1879 = vmatmul.mubr.bf16.gmra.mrb[0].mxu0 %v1543
        %v1880 = vpop.f32.mrb[0].mxu0
        %v1881 = vadd.f32 %v1840, %v1880
        %v1882 = vpop.f32.mrb[0].mxu0
        %v1883 = vpop.f32.mrb[0].mxu0
        %v1884 = vadd.f32 %v1843, %v1883
        %v1885 = vpop.f32.mrb[0].mxu0
        %1886 = vdwg.mxu0
        %v1887 = vadd.f32 %v281, %v1881
        %v1888 = vadd.f32 %v282, %v1884
        %v1889 = vsel %vm284, %v1887, 0.0
        %1890 = vadd.xlane.f32.xlu0 %v1889
        %v1891 = vpop.xlane.xlu0 %1890
        %v1892 = vsel %vm284, %v1888, 0.0
        %1893 = vadd.xlane.f32.xlu0 %v1892
        %v1894 = vpop.xlane.xlu0 %1893
        %v1895 = vmul.f32 %v1891, %v291
        %v1896 = vmul.f32 %v1894, %v291
        %v1897 = vsub.f32 %v1887, %v1895
        %v1898 = vsub.f32 %v1888, %v1896
        %v1899 = vmul.f32 %v1897, %v1897
        %v1900 = vmul.f32 %v1898, %v1898
        %v1901 = vsel %vm284, %v1899, 0.0
        %1902 = vadd.xlane.f32.xlu0 %v1901
        %v1903 = vpop.xlane.xlu0 %1902
        %v1904 = vsel %vm284, %v1900, 0.0
        %1905 = vadd.xlane.f32.xlu0 %v1904
        %v1906 = vpop.xlane.xlu0 %1905
        %v1907 = vmul.f32 %v1903, %v291
        %v1908 = vmul.f32 %v1906, %v291
        %v1909 = vadd.f32 %v1907, 1e-05
        %v1910 = vadd.f32 %v1908, 1e-05
        %v1911 = vrsqrt.pop %v1909
        %v1912 = vrsqrt.pop %v1910
        %v1913 = vmul.f32 %v1897, %v1911
        %v1914 = vmul.f32 %v1898, %v1912
        %v1915 = vlaneseq
        %v1916 = vshrl.u32 %v1915, 7
        %v1917 = vsub.s32 2, %v1916
        %v1918 = vrot.slane %v283, %v1917
        %v1919 = vmul.f32 %v1913, %v1918
        %v1920 = vmul.f32 %v1914, %v1918
        %v1921 = vlaneseq
        %v1922 = vshrl.u32 %v1921, 7
        %v1923 = vsub.s32 3, %v1922
        %v1924 = vrot.slane %v283, %v1923
        %v1925 = vadd.f32 %v1919, %v1924
        %v1926 = vadd.f32 %v1920, %v1924
        %v1927 = vpack.c.bf16 %v1926, %v1925
        %v1928 = vld [vmem:[%s4] sm:$0xf]
        %v1929 = vld [vmem:[%s4 + $0x4] sm:$0xf]
        %v1930 = vld [vmem:[%s4 + $0x8] sm:$0xf]
        %v1931 = vld [vmem:[%s4 + $0xc] sm:$0xf]
        %v1932 = vlaneseq
        %v1933 = vshrl.u32 %v1932, 7
        %v1934 = vsub.s32 6, %v1933
        %v1935 = vrot.slane %v283, %v1934
        %v1940 = vunpack.c.l.b16 %v1928
        %v1941 = vunpack.c.l.b16 %v1929
        %v1942 = vunpack.c.l.b16 %v1930
        %v1943 = vunpack.c.l.b16 %v1931
        %v1944 = vpack.c.b16 %v1941, %v1940
        %v1945 = vpack.c.b16 %v1943, %v1942
        %v1949 = vsel %vm284, %v1927, 0
        %1951 = vmatprep.subr.bf16.mxu0 0
        %1952 = vmatpush1.bf16.msra.mxu0 %v1944
        %1953 = vmatprep.subr.bf16.mxu0 0
        %1954 = vmatpush1.bf16.msra.mxu0 %v1945
        %1955 = vmatprep.subr.bf16.mxu0 0
        %1956 = vmatpush1.bf16.msra.mxu0 0
        %1957 = vmatprep.subr.bf16.mxu0 0
        %1958 = vmatpush1.bf16.msra.mxu0 0
        %1959 = vmatprep.subr.bf16.mxu0 0
        %1960 = vmatpush1.bf16.msra.mxu0 0
        %1961 = vmatprep.subr.bf16.mxu0 0
        %1962 = vmatpush1.bf16.msra.mxu0 0
        %1963 = vmatprep.subr.bf16.mxu0 0
        %1964 = vmatpush1.bf16.msra.mxu0 0
        %1965 = vmatprep.subr.bf16.mxu0 0
        %1966 = vmatpush1.bf16.msra.mxu0 0
        %1967 = vmatprep.subr.bf16.mxu0 0
        %1968 = vmatpush1.bf16.msra.mxu0 0
        %1969 = vmatprep.subr.bf16.mxu0 0
        %1970 = vmatpush1.bf16.msra.mxu0 0
        %1971 = vmatprep.subr.bf16.mxu0 0
        %1972 = vmatpush1.bf16.msra.mxu0 0
        %1973 = vmatprep.subr.bf16.mxu0 0
        %1974 = vmatpush1.bf16.msra.mxu0 0
        %1975 = vmatprep.subr.bf16.mxu0 0
        %1976 = vmatpush1.bf16.msra.mxu0 0
        %1977 = vmatprep.subr.bf16.mxu0 0
        %1978 = vmatpush1.bf16.msra.mxu0 0
        %1979 = vmatprep.subr.bf16.mxu0 0
        %1980 = vmatpush1.bf16.msra.mxu0 0
        %1981 = vmatprep.subr.bf16.mxu0 0
        %1982 = vmatpush1.bf16.msra.mxu0 0
        %1983 = vmatprep.mubr.bf16.mxu0 0
        %1984 = vmatmul.mubr.bf16.gmra.mrb[0].mxu0 %v1949
        %v1985 = vpop.f32.mrb[0].mxu0
        %v1986 = vadd.f32 %v1935, %v1985
        %v1987 = vpop.f32.mrb[0].mxu0
        %v1988 = vpop.f32.mrb[0].mxu0
        %v1989 = vadd.f32 %v1935, %v1988
        %v1990 = vpop.f32.mrb[0].mxu0
        %1991 = vdwg.mxu0
        %v1992 = vmax.f32 %v1986, 0.0
        %v1993 = vmax.f32 %v1989, 0.0
        %v1994 = vpack.c.bf16 %v1993, %v1992
        %v1995 = vld [vmem:[%s5] sm:$0xf]
        %v1996 = vld [vmem:[%s5 + $0x4] sm:$0xf]
        %v1997 = vld [vmem:[%s5 + $0x8] sm:$0xf]
        %v1998 = vld [vmem:[%s5 + $0xc] sm:$0xf]
        %v1999 = vld [vmem:[%s5 + $0x10] sm:$0xf]
        %v2000 = vld [vmem:[%s5 + $0x14] sm:$0xf]
        %v2001 = vld [vmem:[%s5 + $0x18] sm:$0xf]
        %v2002 = vld [vmem:[%s5 + $0x1c] sm:$0xf]
        %v2003 = vld [vmem:[%s5 + $0x20] sm:$0xf]
        %v2004 = vld [vmem:[%s5 + $0x24] sm:$0xf]
        %v2005 = vld [vmem:[%s5 + $0x28] sm:$0xf]
        %v2006 = vld [vmem:[%s5 + $0x2c] sm:$0xf]
        %v2007 = vld [vmem:[%s5 + $0x30] sm:$0xf]
        %v2008 = vld [vmem:[%s5 + $0x34] sm:$0xf]
        %v2009 = vld [vmem:[%s5 + $0x38] sm:$0xf]
        %v2010 = vld [vmem:[%s5 + $0x3c] sm:$0xf]
        %v2011 = vlaneseq
        %v2012 = vshrl.u32 %v2011, 7
        %v2013 = vsub.s32 5, %v2012
        %v2014 = vrot.slane %v283, %v2013
        %v2031 = vunpack.c.l.b16 %v1995
        %v2032 = vunpack.c.l.b16 %v1996
        %v2033 = vunpack.c.l.b16 %v1997
        %v2034 = vunpack.c.l.b16 %v1998
        %v2035 = vunpack.c.l.b16 %v1999
        %v2036 = vunpack.c.l.b16 %v2000
        %v2037 = vunpack.c.l.b16 %v2001
        %v2038 = vunpack.c.l.b16 %v2002
        %v2039 = vunpack.c.l.b16 %v2003
        %v2040 = vunpack.c.l.b16 %v2004
        %v2041 = vunpack.c.l.b16 %v2005
        %v2042 = vunpack.c.l.b16 %v2006
        %v2043 = vunpack.c.l.b16 %v2007
        %v2044 = vunpack.c.l.b16 %v2008
        %v2045 = vunpack.c.l.b16 %v2009
        %v2046 = vunpack.c.l.b16 %v2010
        %v2047 = vpack.c.b16 %v2032, %v2031
        %v2048 = vpack.c.b16 %v2034, %v2033
        %v2049 = vpack.c.b16 %v2036, %v2035
        %v2050 = vpack.c.b16 %v2038, %v2037
        %v2051 = vpack.c.b16 %v2040, %v2039
        %v2052 = vpack.c.b16 %v2042, %v2041
        %v2053 = vpack.c.b16 %v2044, %v2043
        %v2054 = vpack.c.b16 %v2046, %v2045
        %2063 = vmatprep.subr.bf16.mxu0 0
        %2064 = vmatpush1.bf16.msra.mxu0 %v2047
        %2065 = vmatprep.subr.bf16.mxu0 0
        %2066 = vmatpush1.bf16.msra.mxu0 %v2048
        %2067 = vmatprep.subr.bf16.mxu0 0
        %2068 = vmatpush1.bf16.msra.mxu0 %v2049
        %2069 = vmatprep.subr.bf16.mxu0 0
        %2070 = vmatpush1.bf16.msra.mxu0 %v2050
        %2071 = vmatprep.subr.bf16.mxu0 0
        %2072 = vmatpush1.bf16.msra.mxu0 %v2051
        %2073 = vmatprep.subr.bf16.mxu0 0
        %2074 = vmatpush1.bf16.msra.mxu0 %v2052
        %2075 = vmatprep.subr.bf16.mxu0 0
        %2076 = vmatpush1.bf16.msra.mxu0 %v2053
        %2077 = vmatprep.subr.bf16.mxu0 0
        %2078 = vmatpush1.bf16.msra.mxu0 %v2054
        %2079 = vmatprep.subr.bf16.mxu0 0
        %2080 = vmatpush1.bf16.msra.mxu0 0
        %2081 = vmatprep.subr.bf16.mxu0 0
        %2082 = vmatpush1.bf16.msra.mxu0 0
        %2083 = vmatprep.subr.bf16.mxu0 0
        %2084 = vmatpush1.bf16.msra.mxu0 0
        %2085 = vmatprep.subr.bf16.mxu0 0
        %2086 = vmatpush1.bf16.msra.mxu0 0
        %2087 = vmatprep.subr.bf16.mxu0 0
        %2088 = vmatpush1.bf16.msra.mxu0 0
        %2089 = vmatprep.subr.bf16.mxu0 0
        %2090 = vmatpush1.bf16.msra.mxu0 0
        %2091 = vmatprep.subr.bf16.mxu0 0
        %2092 = vmatpush1.bf16.msra.mxu0 0
        %2093 = vmatprep.subr.bf16.mxu0 0
        %2094 = vmatpush1.bf16.msra.mxu0 0
        %2095 = vmatprep.mubr.bf16.mxu0 0
        %2096 = vmatmul.mubr.bf16.gmra.mrb[0].mxu0 %v1994
        %v2097 = vpop.f32.mrb[0].mxu0
        %v2098 = vadd.f32 %v2014, %v2097
        %v2099 = vpop.f32.mrb[0].mxu0
        %v2100 = vpop.f32.mrb[0].mxu0
        %v2101 = vadd.f32 %v2014, %v2100
        %v2102 = vpop.f32.mrb[0].mxu0
        %2103 = vdwg.mxu0
        %v2104 = vadd.f32 %v1887, %v2098
        %v2105 = vadd.f32 %v1888, %v2101
        %2106 = vst.msk [vmem:[%s272] sm:$0xff] %vm284, %v2104
        %2107 = vst.msk [vmem:[%s272 + $0x8] sm:$0xff] %vm284, %v2105
        %s2108 = sand.u32 %s181, 1
        %s2109 = scalar_lea.sflag [#allocation3], %s2108
        %s2110 = sand.u32 %s181, 1
        %s2111 = smul.addr %s2110, 16
        %s2112 = scalar_lea.vmem [#allocation2], %s2111
        // Predicated region
        $region49: #{tpu_custom_call.1} parent=47 // pred_check
          %p2113 = pneg %p191
        $region50: #{tpu_custom_call.1} parent=47 // pred_check_branch
          %2115 = sbr.rel (%p2113) target = $region52
        $region51: #{tpu_custom_call.1} parent=47 // pred_region
          %s2116 = smul.u32 2, %s21
          %s2118 = ssub.s32 256, 256
          %2119 = vsyncadd %s2109, %s2118
          %s2120 = smul.addr %s2116, 128
          %s2121 = scalar_lea.hbm %s7, %s2120
          %s2122 = sshll.u32 %s2112, 4
          %s2123 = int_to_ptr.vmem [resolvable:$true] %s2122
          %2128 = dma.vmem_to_hbm [thread:$0]  %s2123, 256, %s2121, %s2109, 128, 128, 8
        $region52: #{tpu_custom_call.1} parent=47 // pred_fallthru
          _
      $region48: #{tpu_custom_call.1} parent=5 // pred_fallthru
        _
      %p2129 = scmp.le.s32.totalorder 2, %s16
      // Predicated region
      $region53: #{tpu_custom_call.1} parent=5 // pred_check
        %p2130 = pneg %p2129
      $region54: #{tpu_custom_call.1} parent=5 // pred_check_branch
        %2132 = sbr.rel (%p2130) target = $region56
      $region55: #{tpu_custom_call.1} parent=5 // pred_region
        %s2133 = ssub.s32 %s16, 2
        // Predicated region
        $region57: #{tpu_custom_call.1} parent=55 // pred_check
          %p2134 = pneg %p197
        $region58: #{tpu_custom_call.1} parent=55 // pred_check_branch
          %2136 = sbr.rel (%p2134) target = $region60
        $region59: #{tpu_custom_call.1} parent=55 // pred_region
          %s2137 = sand.u32 %s182, 1
          %s2138 = scalar_lea.sflag [#allocation3], %s2137
          %s2139 = sand.u32 %s182, 1
          %s2140 = smul.addr %s2139, 16
          %s2141 = scalar_lea.vmem [#allocation2], %s2140
          %2142 = dma.done %s2138, 256
        $region60: #{tpu_custom_call.1} parent=55 // pred_fallthru
          _
      $region56: #{tpu_custom_call.1} parent=5 // pred_fallthru
        _
    $region6: #{tpu_custom_call.1} parent=1 // loop_footer
      %s20 = sadd.s32 1, %s16
    $region7: #{tpu_custom_call.1} parent=1 // loop_footer_branch
      %15 = sbr.rel target = $region3
    $region8: #{tpu_custom_call.1} parent=1 // loop_exit
      _
    %2143 = vsyncpa [#allocation3], 1
    %s2144 = scalar_lea.sflag [#allocation3], 1
    %2145 = vsyncpa %s2144, 1

</llo_original>
